<compile_context>
chip_gen: v7x
topology: tpu7x:2x2x1
jax: 0.10.0
libtpu: 0.0.40
codegen_flags: <defaults>
</compile_context>

<pallas_src>
import functools

import jax
import jax.numpy as jnp
from jax import lax
from jax.experimental import pallas as pl
from jax.experimental.pallas import tpu as pltpu


# ----------------------------- kernels --------------------------------------


def _gram_fold_kernel(x_ref, wjk_ref, bjk_ref, wi_ref, bi_ref, wr_ref,
                      br_ref, e_ref, wf_ref, bf_ref, g_acc, *, d):
    """Pass 1: stream x (channels-first tiles), accumulate G^T = fk @ fj^T.

    On the last grid step, fold everything data-dependent into the single
    (c, cin) output weight and (c, 1) bias used by pass 2:
        m  = Wr @ (G^T / 10368)                  (c, d)
        Wf = E + m @ Wi                          (c, cin)   (E = residual selector)
        bf = m @ bi + br                         (c, 1)
    """
    @pl.when(pl.program_id(0) == 0)
    def _():
        g_acc[...] = jnp.zeros_like(g_acc)

    # fused j/k projection of this voxel tile: (2d, tile)
    fjk = jnp.dot(wjk_ref[...], x_ref[...],
                  preferred_element_type=jnp.float32) + bjk_ref[...]
    fj = fjk[:d, :]
    fk = fjk[d:, :]

    # partial Gram (contraction over the voxel / lane axis): g_acc holds G^T
    g_acc[...] += lax.dot_general(
        fk, fj, dimension_numbers=(((1,), (1,)), ((), ())),
        preferred_element_type=jnp.float32)

    @pl.when(pl.program_id(0) == pl.num_programs(0) - 1)
    def _():
        # NOTE: the reference divides by the *literal* 10368 (= 18*24*24),
        # independent of the actual voxel count — reproduced exactly here.
        m = jnp.dot(wr_ref[...], g_acc[...] * (1.0 / 10368.0),
                    preferred_element_type=jnp.float32)          # (c, d)
        wf_ref[...] = e_ref[...] + jnp.dot(
            m, wi_ref[...], preferred_element_type=jnp.float32)  # (c, cin)
        # bi_ref is (1, d): broadcast-multiply + lane reduce == m @ bi_col
        bf_ref[...] = (jnp.sum(m * bi_ref[...], axis=1, keepdims=True)
                       + br_ref[...])                            # (c, 1)


def _apply_kernel(x_ref, wf_ref, bf_ref, o_ref):
    """Pass 2: out = Wf @ x + bf  (residual + i-proj + attention + restore)."""
    o_ref[...] = jnp.dot(wf_ref[...], x_ref[...],
                         preferred_element_type=jnp.float32) + bf_ref[...]


# ----------------------------- wrapper ---------------------------------------


def _pick_tile(n, max_tile=2048):
    """Largest multiple of 128 that divides n (prefer >= 2 grid steps)."""
    cands = [t for t in range(128, min(max_tile, n) + 1, 128) if n % t == 0]
    if not cands:
        return n                      # tiny inputs: one full-width block
    multi = [t for t in cands if n // t >= 2]
    return max(multi) if multi else max(cands)


def non_local_bb_forward(features, coord, params, *, tile=None):
    """features: (1, c, D, H, W) f32;  coord: (1, 3, D, H, W) f32."""
    b, c, D, H, W = features.shape
    assert b == 1
    d = c // 2
    cin = c + 3
    N = D * H * W

    # channels-first flattening: NO transposes, this is the native layout.
    feat_t = features[0].reshape(c, N)
    coord_t = coord[0].reshape(3, N)
    x_t = jnp.concatenate([coord_t, feat_t], axis=0)            # (cin, N)

    wi = params["wi"].reshape(d, cin)
    bi = params["bi"].reshape(1, d)
    wj = params["wj"].reshape(d, cin)
    bj = params["bj"].reshape(d, 1)
    wk = params["wk"].reshape(d, cin)
    bk = params["bk"].reshape(d, 1)
    wr = params["wr"].reshape(c, d)
    br = params["br"].reshape(c, 1)

    wjk = jnp.concatenate([wj, wk], axis=0)                     # (2d, cin)
    bjk = jnp.concatenate([bj, bk], axis=0)                     # (2d, 1)
    # residual selector: rows 3.. of x_t are exactly the feature channels
    e_t = jnp.concatenate([jnp.zeros((c, 3), jnp.float32),
                           jnp.eye(c, dtype=jnp.float32)], axis=1)  # (c, cin)

    if tile is None:
        tile = _pick_tile(N)
    assert N % tile == 0
    n_steps = N // tile

    # --- pass 1: Gram matrix + weight folding --------------------------------
    wf, bf = pl.pallas_call(
        functools.partial(_gram_fold_kernel, d=d),
        out_shape=[jax.ShapeDtypeStruct((c, cin), jnp.float32),
                   jax.ShapeDtypeStruct((c, 1), jnp.float32)],
        grid_spec=pltpu.PrefetchScalarGridSpec(
            num_scalar_prefetch=0,
            grid=(n_steps,),
            in_specs=[
                pl.BlockSpec((cin, tile), lambda i: (0, i)),    # x tile
                pl.BlockSpec((2 * d, cin), lambda i: (0, 0)),   # wjk
                pl.BlockSpec((2 * d, 1), lambda i: (0, 0)),     # bjk
                pl.BlockSpec((d, cin), lambda i: (0, 0)),       # wi
                pl.BlockSpec((1, d), lambda i: (0, 0)),         # bi
                pl.BlockSpec((c, d), lambda i: (0, 0)),         # wr
                pl.BlockSpec((c, 1), lambda i: (0, 0)),         # br
                pl.BlockSpec((c, cin), lambda i: (0, 0)),       # residual E
            ],
            out_specs=[pl.BlockSpec((c, cin), lambda i: (0, 0)),
                       pl.BlockSpec((c, 1), lambda i: (0, 0))],
            scratch_shapes=[pltpu.VMEM((d, d), jnp.float32)],
        ),
        compiler_params=pltpu.CompilerParams(
            dimension_semantics=("arbitrary",)),                # reduction axis
    )(x_t, wjk, bjk, wi, bi, wr, br, e_t)

    # --- pass 2: single fused matmul (residual already folded into wf) -------
    out_t = pl.pallas_call(
        _apply_kernel,
        out_shape=jax.ShapeDtypeStruct((c, N), jnp.float32),
        grid_spec=pltpu.PrefetchScalarGridSpec(
            num_scalar_prefetch=0,
            grid=(n_steps,),
            in_specs=[
                pl.BlockSpec((cin, tile), lambda i: (0, i)),    # x tile
                pl.BlockSpec((c, cin), lambda i: (0, 0)),       # folded weight
                pl.BlockSpec((c, 1), lambda i: (0, 0)),         # folded bias
            ],
            out_specs=pl.BlockSpec((c, tile), lambda i: (0, i)),  # lane-dense
        ),
        compiler_params=pltpu.CompilerParams(
            dimension_semantics=("parallel",)),
    )(x_t, wf, bf)

    return out_t.reshape(1, c, D, H, W)


# ----------------------------- reference (pure JAX, original op order) -------


def non_local_bb_reference(features, coord, params):
    _, c, D, H, W = features.shape
    d = c // 2
    cin = c + 3
    N = D * H * W
    feat_flat = jnp.transpose(features[0], (1, 2, 3, 0)).reshape(N, c)
    coord_flat = jnp.transpose(coord[0], (1, 2, 3, 0)).reshape(N, 3)
    xcat = jnp.concatenate([coord_flat, feat_flat], axis=1)
    fi = xcat @ params["wi"].reshape(d, cin).T + params["bi"]
    fj = (xcat @ params["wj"].reshape(d, cin).T + params["bj"]).T   # (d, N)
    fk = xcat @ params["wk"].reshape(d, cin).T + params["bk"]
    attn = (fi @ fj) / 10368.0
    y = attn @ fk
    z = y @ params["wr"].reshape(c, d).T + params["br"]
    out_flat = feat_flat + z
    return jnp.transpose(out_flat.reshape(D, H, W, c), (3, 0, 1, 2))[None]


# ----------------------------- parameter init --------------------------------


def init_params(key, c):
    """Deterministic PyTorch-Conv3d-like init (uniform +-1/sqrt(fan_in))."""
    d = c // 2
    cin = c + 3
    keys = jax.random.split(key, 8)

    def u(k, shape, fan_in):
        b = 1.0 / jnp.sqrt(fan_in)
        return jax.random.uniform(k, shape, jnp.float32, -b, b)

    return {
        "wi": u(keys[0], (d, cin, 1, 1, 1), cin),
        "bi": u(keys[1], (d,), cin),
        "wj": u(keys[2], (d, cin, 1, 1, 1), cin),
        "bj": u(keys[3], (d,), cin),
        "wk": u(keys[4], (d, cin, 1, 1, 1), cin),
        "bk": u(keys[5], (d,), cin),
        "wr": u(keys[6], (c, d, 1, 1, 1), d),
        "br": u(keys[7], (c,), d),
    }


def make_global_coordinate(D, H, W):
    """Mirrors the module's normalized-coordinate grid minus 0.5."""
    l_idx = jnp.arange(D, dtype=jnp.float32) / (D - 1)
    h_idx = jnp.arange(H, dtype=jnp.float32) / (H - 1)
    w_idx = jnp.arange(W, dtype=jnp.float32) / (W - 1)
    grid = jnp.stack(jnp.meshgrid(l_idx, h_idx, w_idx, indexing="ij"), axis=0)
    return (grid - 0.5)[None]                                     # (1,3,D,H,W)


# ----------------------------- main -------------------------------------------


if __name__ == "__main__":
    # Small, TPU-friendly shapes consistent with the module's forward:
    # batch=1 (forward uses .squeeze()), c=16 channels, spatial (2, 8, 16).
    c, D, H, W = 16, 2, 8, 16                    # N_vox = 256
    key = jax.random.PRNGKey(0)
    k_feat, k_par = jax.random.split(key)

    features = jax.random.normal(k_feat, (1, c, D, H, W), dtype=jnp.float32)
    coord = make_global_coordinate(D, H, W)
    params = init_params(k_par, c)

    fwd = jax.jit(non_local_bb_forward)
    out = jax.block_until_ready(fwd(features, coord, params))

    ref = non_local_bb_reference(features, coord, params)
    assert out.shape == features.shape
    max_err = float(jnp.max(jnp.abs(out - ref)))
    assert jnp.allclose(out, ref, rtol=1e-4, atol=1e-4), max_err

    print("KERNEL_OK")
</pallas_src>

<mosaic_0001>
module attributes {stable_mosaic.version = 11 : i64} {
  func.func @_apply_kernel(%arg0: i32, %arg1: memref<19x128xf32, #tpu.memory_space<vmem>>, %arg2: memref<16x19xf32, #tpu.memory_space<vmem>>, %arg3: memref<16x1xf32, #tpu.memory_space<vmem>>, %arg4: memref<16x128xf32, #tpu.memory_space<vmem>>) attributes {dimension_semantics = [#tpu.dimension_semantics<parallel>], iteration_bounds = array<i64: 2>, scalar_prefetch = 0 : i64, scratch_operands = 0 : i64, tpu.core_type = #tpu.core_type<tc>, window_params = [{transform_indices = @transform_0, window_bounds = array<i64: 19, 128>}, {pipeline_mode = #tpu.pipeline_mode<synchronous>, transform_indices = @transform_1, window_bounds = array<i64: 16, 19>}, {pipeline_mode = #tpu.pipeline_mode<synchronous>, transform_indices = @transform_2, window_bounds = array<i64: 16, 1>}, {transform_indices = @transform_3, window_bounds = array<i64: 16, 128>}]} {
    %c0 = arith.constant 0 : index
    %c0_0 = arith.constant 0 : index
    %0 = vector.load %arg2[%c0, %c0_0] : memref<16x19xf32, #tpu.memory_space<vmem>>, vector<16x19xf32>
    %c0_1 = arith.constant 0 : index
    %c0_2 = arith.constant 0 : index
    %1 = vector.load %arg1[%c0_1, %c0_2] : memref<19x128xf32, #tpu.memory_space<vmem>>, vector<19x128xf32>
    %cst = arith.constant dense<0.000000e+00> : vector<16x128xf32>
    %2 = tpu.matmul %0, %1, %cst {dimension_numbers = #tpu.dot_dimension_numbers<[1], [0], [0], [1], [0, 0, 1, 1], [], []>} : vector<16x19xf32>, vector<19x128xf32>, vector<16x128xf32> -> vector<16x128xf32>
    %c0_3 = arith.constant 0 : index
    %c0_4 = arith.constant 0 : index
    %3 = vector.load %arg3[%c0_3, %c0_4] : memref<16x1xf32, #tpu.memory_space<vmem>>, vector<16x1xf32>
    %4 = vector.broadcast %3 : vector<16x1xf32> to vector<16x128xf32>
    %5 = arith.addf %2, %4 : vector<16x128xf32>
    %c0_5 = arith.constant 0 : index
    %c0_6 = arith.constant 0 : index
    %6 = vector.load %arg4[%c0_5, %c0_6] : memref<16x128xf32, #tpu.memory_space<vmem>>, vector<16x128xf32>
    tpu.vector_store %arg4[%c0_5, %c0_6], %5 {strides = array<i32>} : memref<16x128xf32, #tpu.memory_space<vmem>>, vector<16x128xf32>,
    return
  }
  func.func @transform_0(%arg0: i32) -> (i32, i32) {
    %c0_i32 = arith.constant 0 : i32
    %c0_i32_0 = arith.constant 0 : i32
    return %c0_i32, %arg0 : i32, i32
  }
  func.func @transform_1(%arg0: i32) -> (i32, i32) {
    %c0_i32 = arith.constant 0 : i32
    %c0_i32_0 = arith.constant 0 : i32
    %c0_i32_1 = arith.constant 0 : i32
    return %c0_i32, %c0_i32_0 : i32, i32
  }
  func.func @transform_2(%arg0: i32) -> (i32, i32) {
    %c0_i32 = arith.constant 0 : i32
    %c0_i32_0 = arith.constant 0 : i32
    %c0_i32_1 = arith.constant 0 : i32
    return %c0_i32, %c0_i32_0 : i32, i32
  }
  func.func @transform_3(%arg0: i32) -> (i32, i32) {
    %c0_i32 = arith.constant 0 : i32
    %c0_i32_0 = arith.constant 0 : i32
    return %c0_i32, %arg0 : i32, i32
  }
}

module attributes {stable_mosaic.version = 11 : i64} {
  func.func @_gram_fold_kernel(%arg0: i32, %arg1: memref<19x128xf32, #tpu.memory_space<vmem>>, %arg2: memref<16x19xf32, #tpu.memory_space<vmem>>, %arg3: memref<16x1xf32, #tpu.memory_space<vmem>>, %arg4: memref<8x19xf32, #tpu.memory_space<vmem>>, %arg5: memref<1x8xf32, #tpu.memory_space<vmem>>, %arg6: memref<16x8xf32, #tpu.memory_space<vmem>>, %arg7: memref<16x1xf32, #tpu.memory_space<vmem>>, %arg8: memref<16x19xf32, #tpu.memory_space<vmem>>, %arg9: memref<16x19xf32, #tpu.memory_space<vmem>>, %arg10: memref<16x1xf32, #tpu.memory_space<vmem>>, %arg11: memref<8x8xf32, #tpu.memory_space<vmem>>) attributes {dimension_semantics = [#tpu.dimension_semantics<arbitrary>], iteration_bounds = array<i64: 2>, scalar_prefetch = 0 : i64, scratch_operands = 1 : i64, tpu.core_type = #tpu.core_type<tc>, window_params = [{transform_indices = @transform_0, window_bounds = array<i64: 19, 128>}, {pipeline_mode = #tpu.pipeline_mode<synchronous>, transform_indices = @transform_1, window_bounds = array<i64: 16, 19>}, {pipeline_mode = #tpu.pipeline_mode<synchronous>, transform_indices = @transform_2, window_bounds = array<i64: 16, 1>}, {pipeline_mode = #tpu.pipeline_mode<synchronous>, transform_indices = @transform_3, window_bounds = array<i64: 8, 19>}, {pipeline_mode = #tpu.pipeline_mode<synchronous>, transform_indices = @transform_4, window_bounds = array<i64: 1, 8>}, {pipeline_mode = #tpu.pipeline_mode<synchronous>, transform_indices = @transform_5, window_bounds = array<i64: 16, 8>}, {pipeline_mode = #tpu.pipeline_mode<synchronous>, transform_indices = @transform_6, window_bounds = array<i64: 16, 1>}, {pipeline_mode = #tpu.pipeline_mode<synchronous>, transform_indices = @transform_7, window_bounds = array<i64: 16, 19>}, {pipeline_mode = #tpu.pipeline_mode<synchronous>, transform_indices = @transform_8, window_bounds = array<i64: 16, 19>}, {pipeline_mode = #tpu.pipeline_mode<synchronous>, transform_indices = @transform_9, window_bounds = array<i64: 16, 1>}]} {
    %c0_i32 = arith.constant 0 : i32
    %0 = arith.cmpi eq, %arg0, %c0_i32 : i32
    %1 = arith.extui %0 : i1 to i32
    %c0_i32_0 = arith.constant 0 : i32
    %2 = arith.cmpi ne, %1, %c0_i32_0 : i32
    scf.if %2 {
      %cst_12 = arith.constant 0.000000e+00 : f32
      %18 = vector.broadcast %cst_12 : f32 to vector<8x8xf32>
      %c0_13 = arith.constant 0 : index
      %c0_14 = arith.constant 0 : index
      %19 = vector.load %arg11[%c0_13, %c0_14] : memref<8x8xf32, #tpu.memory_space<vmem>>, vector<8x8xf32>
      tpu.vector_store %arg11[%c0_13, %c0_14], %18 {strides = array<i32>} : memref<8x8xf32, #tpu.memory_space<vmem>>, vector<8x8xf32>,
    } else {
    }
    %c0 = arith.constant 0 : index
    %c0_1 = arith.constant 0 : index
    %3 = vector.load %arg2[%c0, %c0_1] : memref<16x19xf32, #tpu.memory_space<vmem>>, vector<16x19xf32>
    %c0_2 = arith.constant 0 : index
    %c0_3 = arith.constant 0 : index
    %4 = vector.load %arg1[%c0_2, %c0_3] : memref<19x128xf32, #tpu.memory_space<vmem>>, vector<19x128xf32>
    %cst = arith.constant dense<0.000000e+00> : vector<16x128xf32>
    %5 = tpu.matmul %3, %4, %cst {dimension_numbers = #tpu.dot_dimension_numbers<[1], [0], [0], [1], [0, 0, 1, 1], [], []>} : vector<16x19xf32>, vector<19x128xf32>, vector<16x128xf32> -> vector<16x128xf32>
    %c0_4 = arith.constant 0 : index
    %c0_5 = arith.constant 0 : index
    %6 = vector.load %arg3[%c0_4, %c0_5] : memref<16x1xf32, #tpu.memory_space<vmem>>, vector<16x1xf32>
    %7 = vector.broadcast %6 : vector<16x1xf32> to vector<16x128xf32>
    %8 = arith.addf %5, %7 : vector<16x128xf32>
    %9 = vector.extract_strided_slice %8 {offsets = [0, 0], sizes = [8, 128], strides = [1, 1]} : vector<16x128xf32> to vector<8x128xf32>
    %10 = vector.extract_strided_slice %8 {offsets = [8, 0], sizes = [8, 128], strides = [1, 1]} : vector<16x128xf32> to vector<8x128xf32>
    %c0_6 = arith.constant 0 : index
    %c0_7 = arith.constant 0 : index
    %11 = vector.load %arg11[%c0_6, %c0_7] : memref<8x8xf32, #tpu.memory_space<vmem>>, vector<8x8xf32>
    %cst_8 = arith.constant dense<0.000000e+00> : vector<8x8xf32>
    %12 = tpu.matmul %10, %9, %cst_8 {dimension_numbers = #tpu.dot_dimension_numbers<[1], [1], [0], [0], [0, 0, 1, 0], [], []>} : vector<8x128xf32>, vector<8x128xf32>, vector<8x8xf32> -> vector<8x8xf32>
    %13 = arith.addf %11, %12 : vector<8x8xf32>
    %c0_9 = arith.constant 0 : index
    %c0_10 = arith.constant 0 : index
    %14 = vector.load %arg11[%c0_9, %c0_10] : memref<8x8xf32, #tpu.memory_space<vmem>>, vector<8x8xf32>
    tpu.vector_store %arg11[%c0_9, %c0_10], %13 {strides = array<i32>} : memref<8x8xf32, #tpu.memory_space<vmem>>, vector<8x8xf32>,
    %c1_i32 = arith.constant 1 : i32
    %15 = arith.cmpi eq, %arg0, %c1_i32 : i32
    %16 = arith.extui %15 : i1 to i32
    %c0_i32_11 = arith.constant 0 : i32
    %17 = arith.cmpi ne, %16, %c0_i32_11 : i32
    scf.if %17 {
      %c0_12 = arith.constant 0 : index
      %c0_13 = arith.constant 0 : index
      %18 = vector.load %arg6[%c0_12, %c0_13] : memref<16x8xf32, #tpu.memory_space<vmem>>, vector<16x8xf32>
      %c0_14 = arith.constant 0 : index
      %c0_15 = arith.constant 0 : index
      %19 = vector.load %arg11[%c0_14, %c0_15] : memref<8x8xf32, #tpu.memory_space<vmem>>, vector<8x8xf32>
      %cst_16 = arith.constant 9.6450618E-5 : f32
      %20 = vector.broadcast %cst_16 : f32 to vector<8x8xf32>
      %21 = arith.mulf %19, %20 : vector<8x8xf32>
      %cst_17 = arith.constant dense<0.000000e+00> : vector<16x8xf32>
      %22 = tpu.matmul %18, %21, %cst_17 {dimension_numbers = #tpu.dot_dimension_numbers<[1], [0], [0], [1], [0, 0, 1, 1], [], []>} : vector<16x8xf32>, vector<8x8xf32>, vector<16x8xf32> -> vector<16x8xf32>
      %c0_18 = arith.constant 0 : index
      %c0_19 = arith.constant 0 : index
      %23 = vector.load %arg8[%c0_18, %c0_19] : memref<16x19xf32, #tpu.memory_space<vmem>>, vector<16x19xf32>
      %c0_20 = arith.constant 0 : index
      %c0_21 = arith.constant 0 : index
      %24 = vector.load %arg4[%c0_20, %c0_21] : memref<8x19xf32, #tpu.memory_space<vmem>>, vector<8x19xf32>
      %cst_22 = arith.constant dense<0.000000e+00> : vector<16x19xf32>
      %25 = tpu.matmul %22, %24, %cst_22 {dimension_numbers = #tpu.dot_dimension_numbers<[1], [0], [0], [1], [0, 0, 1, 1], [], []>} : vector<16x8xf32>, vector<8x19xf32>, vector<16x19xf32> -> vector<16x19xf32>
      %26 = arith.addf %23, %25 : vector<16x19xf32>
      %c0_23 = arith.constant 0 : index
      %c0_24 = arith.constant 0 : index
      %27 = vector.load %arg9[%c0_23, %c0_24] : memref<16x19xf32, #tpu.memory_space<vmem>>, vector<16x19xf32>
      tpu.vector_store %arg9[%c0_23, %c0_24], %26 {strides = array<i32>} : memref<16x19xf32, #tpu.memory_space<vmem>>, vector<16x19xf32>,
      %c0_25 = arith.constant 0 : index
      %c0_26 = arith.constant 0 : index
      %28 = vector.load %arg5[%c0_25, %c0_26] : memref<1x8xf32, #tpu.memory_space<vmem>>, vector<1x8xf32>
      %29 = vector.broadcast %28 : vector<1x8xf32> to vector<16x8xf32>
      %30 = arith.mulf %22, %29 : vector<16x8xf32>
      %cst_27 = arith.constant dense<0.000000e+00> : vector<16xf32>
      %31 = vector.multi_reduction <add>, %30, %cst_27 [1] : vector<16x8xf32> to vector<16xf32>
      %32 = vector.shape_cast %31 : vector<16xf32> to vector<16x1xf32>
      %c0_28 = arith.constant 0 : index
      %c0_29 = arith.constant 0 : index
      %33 = vector.load %arg7[%c0_28, %c0_29] : memref<16x1xf32, #tpu.memory_space<vmem>>, vector<16x1xf32>
      %34 = arith.addf %32, %33 : vector<16x1xf32>
      %c0_30 = arith.constant 0 : index
      %c0_31 = arith.constant 0 : index
      %35 = vector.load %arg10[%c0_30, %c0_31] : memref<16x1xf32, #tpu.memory_space<vmem>>, vector<16x1xf32>
      tpu.vector_store %arg10[%c0_30, %c0_31], %34 {strides = array<i32>} : memref<16x1xf32, #tpu.memory_space<vmem>>, vector<16x1xf32>,
    } else {
    }
    return
  }
  func.func @transform_0(%arg0: i32) -> (i32, i32) {
    %c0_i32 = arith.constant 0 : i32
    %c0_i32_0 = arith.constant 0 : i32
    return %c0_i32, %arg0 : i32, i32
  }
  func.func @transform_1(%arg0: i32) -> (i32, i32) {
    %c0_i32 = arith.constant 0 : i32
    %c0_i32_0 = arith.constant 0 : i32
    %c0_i32_1 = arith.constant 0 : i32
    return %c0_i32, %c0_i32_0 : i32, i32
  }
  func.func @transform_2(%arg0: i32) -> (i32, i32) {
    %c0_i32 = arith.constant 0 : i32
    %c0_i32_0 = arith.constant 0 : i32
    %c0_i32_1 = arith.constant 0 : i32
    return %c0_i32, %c0_i32_0 : i32, i32
  }
  func.func @transform_3(%arg0: i32) -> (i32, i32) {
    %c0_i32 = arith.constant 0 : i32
    %c0_i32_0 = arith.constant 0 : i32
    %c0_i32_1 = arith.constant 0 : i32
    return %c0_i32, %c0_i32_0 : i32, i32
  }
  func.func @transform_4(%arg0: i32) -> (i32, i32) {
    %c0_i32 = arith.constant 0 : i32
    %c0_i32_0 = arith.constant 0 : i32
    %c0_i32_1 = arith.constant 0 : i32
    return %c0_i32, %c0_i32_0 : i32, i32
  }
  func.func @transform_5(%arg0: i32) -> (i32, i32) {
    %c0_i32 = arith.constant 0 : i32
    %c0_i32_0 = arith.constant 0 : i32
    %c0_i32_1 = arith.constant 0 : i32
    return %c0_i32, %c0_i32_0 : i32, i32
  }
  func.func @transform_6(%arg0: i32) -> (i32, i32) {
    %c0_i32 = arith.constant 0 : i32
    %c0_i32_0 = arith.constant 0 : i32
    %c0_i32_1 = arith.constant 0 : i32
    return %c0_i32, %c0_i32_0 : i32, i32
  }
  func.func @transform_7(%arg0: i32) -> (i32, i32) {
    %c0_i32 = arith.constant 0 : i32
    %c0_i32_0 = arith.constant 0 : i32
    %c0_i32_1 = arith.constant 0 : i32
    return %c0_i32, %c0_i32_0 : i32, i32
  }
  func.func @transform_8(%arg0: i32) -> (i32, i32) {
    %c0_i32 = arith.constant 0 : i32
    %c0_i32_0 = arith.constant 0 : i32
    %c0_i32_1 = arith.constant 0 : i32
    return %c0_i32, %c0_i32_0 : i32, i32
  }
  func.func @transform_9(%arg0: i32) -> (i32, i32) {
    %c0_i32 = arith.constant 0 : i32
    %c0_i32_0 = arith.constant 0 : i32
    %c0_i32_1 = arith.constant 0 : i32
    return %c0_i32, %c0_i32_0 : i32, i32
  }
}

</mosaic_0001>

<llo_original>
// kernel: squeeze.3
$region0: #{squeeze.3}
  %s0 = inlined_call_operand.hbm [shape: f32[1,3,2,8,16], index: 0, kind: input, shape index: {}]
  %s1 = inlined_call_operand.vmem [shape: f32[3,256], index: 1, kind: output, shape index: {}]
  $region1: #{squeeze.3} parent=0
    #allocation0 [shape = 'u8[24576]{0}', space=vmem, size = 0x6000, scoped, tag = 'operand span for operand 0']
    #allocation1 [shape = 's32[1]{0}', space=sflag, size = 0x4, scoped, tag = 'scoped memory for squeeze.3']
    #allocation2 [shape = 'u8[8192]{0}', space=vmem, size = 0x2000, scoped, tag = 'scoped mem for output reshape']
    %2 = vsyncpa [#allocation1], 0
    %s4 = ssub.s32 768, 768
    %5 = vsyncadd [#allocation1], %s4
    %s7 = sshll.u32 [#allocation0], 4
    %s8 = int_to_ptr.vmem [resolvable:$true] %s7
    %10 = dma.hbm_to_vmem [thread:$0]  %s0, 768, %s8, [#allocation1]
    %11 = dma.done [#allocation1], 768
    %v12 = vld [vmem:[#allocation0] ss:$8 sm:$0xf]
    %s13 = smov 48
    %v14 = vld [vmem:[#allocation0] ss:$8 sm:%s13]
    %vm15 = vcmask 1045508
    %v16 = vsel %vm15, %v14, %v12
    %vm17 = vcmask 130048
    %18 = vst.msk [vmem:[#allocation2] ss:$8 sm:$0x3] %vm17, %v16
    %s19 = scalar_lea.vmem [#allocation2], 4294967281
    %20 = vst.msk [vmem:[%s19] ss:$8 sm:$0xc] %vm17, %v16
    %s21 = scalar_lea.vmem [#allocation2], 4294967266
    %22 = vst.msk [vmem:[%s21] ss:$8 sm:$0x30] %vm17, %v16
    %s23 = scalar_lea.vmem [#allocation0], 7
    %s24 = smov 3
    %v25 = vld [vmem:[%s23] ss:$16 sm:%s24]
    %s26 = scalar_lea.vmem [#allocation0], 87
    %s27 = smov 12
    %v28 = vld [vmem:[%s26] ss:$-24 sm:%s27]
    %vm29 = vcmask 1043458
    %v30 = vsel %vm29, %v28, %v25
    %s31 = scalar_lea.vmem [#allocation0], 4294967263
    %s32 = smov 48
    %v33 = vld [vmem:[%s31] ss:$16 sm:%s32]
    %vm34 = vcmask 1045508
    %v35 = vsel %vm34, %v33, %v30
    %36 = vrot.lane.b32.xlu0 %v35, 112
    %v37 = vpop.permute.xlu0 %36
    %vm38 = vcmask 1048448
    %39 = vst.msk [vmem:[#allocation2] sm:$0x7] %vm38, %v37
    %s40 = scalar_lea.vmem [#allocation2], 5
    %41 = vst.msk [vmem:[%s40] sm:$0x38] %vm38, %v37
    %s42 = scalar_lea.vmem [#allocation0], 6
    %s43 = smov 3
    %v44 = vld [vmem:[%s42] ss:$16 sm:%s43]
    %s45 = scalar_lea.vmem [#allocation0], 86
    %s46 = smov 12
    %v47 = vld [vmem:[%s45] ss:$-24 sm:%s46]
    %vm48 = vcmask 1043458
    %v49 = vsel %vm48, %v47, %v44
    %s50 = scalar_lea.vmem [#allocation0], 4294967262
    %s51 = smov 48
    %v52 = vld [vmem:[%s50] ss:$16 sm:%s51]
    %vm53 = vcmask 1045508
    %v54 = vsel %vm53, %v52, %v49
    %55 = vrot.lane.b32.xlu0 %v54, 96
    %v56 = vpop.permute.xlu0 %55
    %vm57 = vcmask 917248
    %58 = vst.msk [vmem:[#allocation2] sm:$0x7] %vm57, %v56
    %s59 = scalar_lea.vmem [#allocation2], 5
    %60 = vst.msk [vmem:[%s59] sm:$0x38] %vm57, %v56
    %s61 = scalar_lea.vmem [#allocation0], 5
    %s62 = smov 3
    %v63 = vld [vmem:[%s61] ss:$16 sm:%s62]
    %s64 = scalar_lea.vmem [#allocation0], 85
    %s65 = smov 12
    %v66 = vld [vmem:[%s64] ss:$-24 sm:%s65]
    %vm67 = vcmask 1043458
    %v68 = vsel %vm67, %v66, %v63
    %s69 = scalar_lea.vmem [#allocation0], 4294967261
    %s70 = smov 48
    %v71 = vld [vmem:[%s69] ss:$16 sm:%s70]
    %vm72 = vcmask 1045508
    %v73 = vsel %vm72, %v71, %v68
    %74 = vrot.lane.b32.xlu0 %v73, 80
    %v75 = vpop.permute.xlu0 %74
    %vm76 = vcmask 786048
    %77 = vst.msk [vmem:[#allocation2] sm:$0x7] %vm76, %v75
    %s78 = scalar_lea.vmem [#allocation2], 5
    %79 = vst.msk [vmem:[%s78] sm:$0x38] %vm76, %v75
    %s80 = scalar_lea.vmem [#allocation0], 4
    %s81 = smov 3
    %v82 = vld [vmem:[%s80] ss:$16 sm:%s81]
    %s83 = scalar_lea.vmem [#allocation0], 84
    %s84 = smov 12
    %v85 = vld [vmem:[%s83] ss:$-24 sm:%s84]
    %vm86 = vcmask 1043458
    %v87 = vsel %vm86, %v85, %v82
    %s88 = scalar_lea.vmem [#allocation0], 4294967260
    %s89 = smov 48
    %v90 = vld [vmem:[%s88] ss:$16 sm:%s89]
    %vm91 = vcmask 1045508
    %v92 = vsel %vm91, %v90, %v87
    %93 = vrot.lane.b32.xlu0 %v92, 64
    %v94 = vpop.permute.xlu0 %93
    %vm95 = vcmask 654848
    %96 = vst.msk [vmem:[#allocation2] sm:$0x7] %vm95, %v94
    %s97 = scalar_lea.vmem [#allocation2], 5
    %98 = vst.msk [vmem:[%s97] sm:$0x38] %vm95, %v94
    %s99 = scalar_lea.vmem [#allocation0], 3
    %s100 = smov 3
    %v101 = vld [vmem:[%s99] ss:$16 sm:%s100]
    %s102 = scalar_lea.vmem [#allocation0], 83
    %s103 = smov 12
    %v104 = vld [vmem:[%s102] ss:$-24 sm:%s103]
    %vm105 = vcmask 1043458
    %v106 = vsel %vm105, %v104, %v101
    %s107 = scalar_lea.vmem [#allocation0], 4294967259
    %s108 = smov 48
    %v109 = vld [vmem:[%s107] ss:$16 sm:%s108]
    %vm110 = vcmask 1045508
    %v111 = vsel %vm110, %v109, %v106
    %112 = vrot.lane.b32.xlu0 %v111, 48
    %v113 = vpop.permute.xlu0 %112
    %vm114 = vcmask 523648
    %115 = vst.msk [vmem:[#allocation2] sm:$0x7] %vm114, %v113
    %s116 = scalar_lea.vmem [#allocation2], 5
    %117 = vst.msk [vmem:[%s116] sm:$0x38] %vm114, %v113
    %s118 = scalar_lea.vmem [#allocation0], 2
    %s119 = smov 3
    %v120 = vld [vmem:[%s118] ss:$16 sm:%s119]
    %s121 = scalar_lea.vmem [#allocation0], 82
    %s122 = smov 12
    %v123 = vld [vmem:[%s121] ss:$-24 sm:%s122]
    %vm124 = vcmask 1043458
    %v125 = vsel %vm124, %v123, %v120
    %s126 = scalar_lea.vmem [#allocation0], 4294967258
    %s127 = smov 48
    %v128 = vld [vmem:[%s126] ss:$16 sm:%s127]
    %vm129 = vcmask 1045508
    %v130 = vsel %vm129, %v128, %v125
    %131 = vrot.lane.b32.xlu0 %v130, 32
    %v132 = vpop.permute.xlu0 %131
    %vm133 = vcmask 392448
    %134 = vst.msk [vmem:[#allocation2] sm:$0x7] %vm133, %v132
    %s135 = scalar_lea.vmem [#allocation2], 5
    %136 = vst.msk [vmem:[%s135] sm:$0x38] %vm133, %v132
    %s137 = scalar_lea.vmem [#allocation0], 1
    %s138 = smov 3
    %v139 = vld [vmem:[%s137] ss:$16 sm:%s138]
    %s140 = scalar_lea.vmem [#allocation0], 81
    %s141 = smov 12
    %v142 = vld [vmem:[%s140] ss:$-24 sm:%s141]
    %vm143 = vcmask 1043458
    %v144 = vsel %vm143, %v142, %v139
    %s145 = scalar_lea.vmem [#allocation0], 4294967257
    %s146 = smov 48
    %v147 = vld [vmem:[%s145] ss:$16 sm:%s146]
    %vm148 = vcmask 1045508
    %v149 = vsel %vm148, %v147, %v144
    %150 = vrot.lane.b32.xlu0 %v149, 16
    %v151 = vpop.permute.xlu0 %150
    %vm152 = vcmask 261248
    %153 = vst.msk [vmem:[#allocation2] sm:$0x7] %vm152, %v151
    %s154 = scalar_lea.vmem [#allocation2], 5
    %155 = vst.msk [vmem:[%s154] sm:$0x38] %vm152, %v151
    %s157 = sshllo.u32 0, 4
    %v159 = vld [vmem:[#allocation2] sm:%s157]
    %s160 = sshllo.u32 0, 4
    %161 = vst [vmem:[%s1] sm:%s160] %v159
    %s162 = scalar_lea.vmem [#allocation2], 8
    %v163 = vld [vmem:[%s162] sm:%s157]
    %s164 = sshllo.u32 0, 4
    %s165 = scalar_lea.vmem %s1, 4
    %166 = vst [vmem:[%s165] sm:%s164] %v163
    %167 = vsyncpa [#allocation1], 1

// kernel: squeeze.2
$region0: #{squeeze.2}
  %s0 = inlined_call_operand.hbm [shape: f32[1,16,2,8,16], index: 0, kind: input, shape index: {}]
  %s1 = inlined_call_operand.vmem [shape: f32[16,256], index: 1, kind: output, shape index: {}]
  $region1: #{squeeze.2} parent=0
    #allocation0 [shape = 'u8[131072]{0}', space=vmem, size = 0x20000, scoped, tag = 'operand span for operand 0']
    #allocation1 [shape = 's32[1]{0}', space=sflag, size = 0x4, scoped, tag = 'scoped memory for squeeze.2']
    %2 = vsyncpa [#allocation1], 0
    %s4 = ssub.s32 4096, 4096
    %5 = vsyncadd [#allocation1], %s4
    %s7 = sshll.u32 [#allocation0], 4
    %s8 = int_to_ptr.vmem [resolvable:$true] %s7
    %10 = dma.hbm_to_vmem [thread:$0]  %s0, 4096, %s8, [#allocation1]
    %11 = dma.done [#allocation1], 4096
    %v12 = vld [vmem:[#allocation0] ss:$8 sm:$0xf]
    %v13 = vld [vmem:[#allocation0] ss:$8 sm:$0xf0]
    %vm14 = vcmask 1047556
    %v15 = vsel %vm14, %v13, %v12
    %vm16 = vcmask 130048
    %17 = vst.msk [vmem:[%s1] ss:$8 sm:$0x3] %vm16, %v15
    %s18 = scalar_lea.vmem %s1, 4294967281
    %19 = vst.msk [vmem:[%s18] ss:$8 sm:$0xc] %vm16, %v15
    %s20 = scalar_lea.vmem %s1, 4294967266
    %21 = vst.msk [vmem:[%s20] ss:$8 sm:$0x30] %vm16, %v15
    %s22 = scalar_lea.vmem %s1, 4294967251
    %23 = vst.msk [vmem:[%s22] ss:$8 sm:$0xc0] %vm16, %v15
    %s24 = scalar_lea.vmem [#allocation0], 64
    %v25 = vld [vmem:[%s24] ss:$8 sm:$0xf]
    %s26 = scalar_lea.vmem [#allocation0], 64
    %v27 = vld [vmem:[%s26] ss:$8 sm:$0xf0]
    %vm28 = vcmask 1047556
    %v29 = vsel %vm28, %v27, %v25
    %vm30 = vcmask 130048
    %s31 = scalar_lea.vmem %s1, 4
    %32 = vst.msk [vmem:[%s31] ss:$8 sm:$0x3] %vm30, %v29
    %s33 = scalar_lea.vmem %s1, 4294967285
    %34 = vst.msk [vmem:[%s33] ss:$8 sm:$0xc] %vm30, %v29
    %s35 = scalar_lea.vmem %s1, 4294967270
    %36 = vst.msk [vmem:[%s35] ss:$8 sm:$0x30] %vm30, %v29
    %s37 = scalar_lea.vmem %s1, 4294967255
    %38 = vst.msk [vmem:[%s37] ss:$8 sm:$0xc0] %vm30, %v29
    %s39 = scalar_lea.vmem [#allocation0], 128
    %v40 = vld [vmem:[%s39] ss:$8 sm:$0xf]
    %s41 = scalar_lea.vmem [#allocation0], 128
    %v42 = vld [vmem:[%s41] ss:$8 sm:$0xf0]
    %vm43 = vcmask 1047556
    %v44 = vsel %vm43, %v42, %v40
    %vm45 = vcmask 130048
    %s46 = scalar_lea.vmem %s1, 16
    %47 = vst.msk [vmem:[%s46] ss:$8 sm:$0x3] %vm45, %v44
    %s48 = scalar_lea.vmem %s1, 1
    %49 = vst.msk [vmem:[%s48] ss:$8 sm:$0xc] %vm45, %v44
    %s50 = scalar_lea.vmem %s1, 4294967282
    %51 = vst.msk [vmem:[%s50] ss:$8 sm:$0x30] %vm45, %v44
    %s52 = scalar_lea.vmem %s1, 4294967267
    %53 = vst.msk [vmem:[%s52] ss:$8 sm:$0xc0] %vm45, %v44
    %s54 = scalar_lea.vmem [#allocation0], 192
    %v55 = vld [vmem:[%s54] ss:$8 sm:$0xf]
    %s56 = scalar_lea.vmem [#allocation0], 192
    %v57 = vld [vmem:[%s56] ss:$8 sm:$0xf0]
    %vm58 = vcmask 1047556
    %v59 = vsel %vm58, %v57, %v55
    %vm60 = vcmask 130048
    %s61 = scalar_lea.vmem %s1, 20
    %62 = vst.msk [vmem:[%s61] ss:$8 sm:$0x3] %vm60, %v59
    %s63 = scalar_lea.vmem %s1, 5
    %64 = vst.msk [vmem:[%s63] ss:$8 sm:$0xc] %vm60, %v59
    %s65 = scalar_lea.vmem %s1, 4294967286
    %66 = vst.msk [vmem:[%s65] ss:$8 sm:$0x30] %vm60, %v59
    %s67 = scalar_lea.vmem %s1, 4294967271
    %68 = vst.msk [vmem:[%s67] ss:$8 sm:$0xc0] %vm60, %v59
    %s69 = scalar_lea.vmem [#allocation0], 7
    %s70 = smov 3
    %v71 = vld [vmem:[%s69] ss:$16 sm:%s70]
    %s72 = scalar_lea.vmem [#allocation0], 7
    %s73 = smov 12
    %v74 = vld [vmem:[%s72] ss:$16 sm:%s73]
    %vm75 = vcmask 1043458
    %v76 = vsel %vm75, %v74, %v71
    %s77 = scalar_lea.vmem [#allocation0], 7
    %s78 = smov 48
    %v79 = vld [vmem:[%s77] ss:$16 sm:%s78]
    %vm80 = vcmask 1045508
    %v81 = vsel %vm80, %v79, %v76
    %s82 = scalar_lea.vmem [#allocation0], 7
    %s83 = smov 192
    %v84 = vld [vmem:[%s82] ss:$16 sm:%s83]
    %vm85 = vcmask 1047558
    %v86 = vsel %vm85, %v84, %v81
    %87 = vrot.lane.b32.xlu0 %v86, 112
    %v88 = vpop.permute.xlu0 %87
    %vm89 = vcmask 1048448
    %90 = vst.msk [vmem:[%s1] sm:$0xff] %vm89, %v88
    %s91 = scalar_lea.vmem [#allocation0], 15
    %s92 = smov 3
    %v93 = vld [vmem:[%s91] ss:$16 sm:%s92]
    %s94 = scalar_lea.vmem [#allocation0], 15
    %s95 = smov 12
    %v96 = vld [vmem:[%s94] ss:$16 sm:%s95]
    %vm97 = vcmask 1043458
    %v98 = vsel %vm97, %v96, %v93
    %s99 = scalar_lea.vmem [#allocation0], 15
    %s100 = smov 48
    %v101 = vld [vmem:[%s99] ss:$16 sm:%s100]
    %vm102 = vcmask 1045508
    %v103 = vsel %vm102, %v101, %v98
    %s104 = scalar_lea.vmem [#allocation0], 15
    %s105 = smov 192
    %v106 = vld [vmem:[%s104] ss:$16 sm:%s105]
    %vm107 = vcmask 1047558
    %v108 = vsel %vm107, %v106, %v103
    %109 = vrot.lane.b32.xlu0 %v108, 112
    %v110 = vpop.permute.xlu0 %109
    %vm111 = vcmask 1048448
    %s112 = scalar_lea.vmem %s1, 8
    %113 = vst.msk [vmem:[%s112] sm:$0xff] %vm111, %v110
    %s114 = scalar_lea.vmem [#allocation0], 135
    %s115 = smov 3
    %v116 = vld [vmem:[%s114] ss:$16 sm:%s115]
    %s117 = scalar_lea.vmem [#allocation0], 135
    %s118 = smov 12
    %v119 = vld [vmem:[%s117] ss:$16 sm:%s118]
    %vm120 = vcmask 1043458
    %v121 = vsel %vm120, %v119, %v116
    %s122 = scalar_lea.vmem [#allocation0], 135
    %s123 = smov 48
    %v124 = vld [vmem:[%s122] ss:$16 sm:%s123]
    %vm125 = vcmask 1045508
    %v126 = vsel %vm125, %v124, %v121
    %s127 = scalar_lea.vmem [#allocation0], 135
    %s128 = smov 192
    %v129 = vld [vmem:[%s127] ss:$16 sm:%s128]
    %vm130 = vcmask 1047558
    %v131 = vsel %vm130, %v129, %v126
    %132 = vrot.lane.b32.xlu0 %v131, 112
    %v133 = vpop.permute.xlu0 %132
    %vm134 = vcmask 1048448
    %s135 = scalar_lea.vmem %s1, 16
    %136 = vst.msk [vmem:[%s135] sm:$0xff] %vm134, %v133
    %s137 = scalar_lea.vmem [#allocation0], 143
    %s138 = smov 3
    %v139 = vld [vmem:[%s137] ss:$16 sm:%s138]
    %s140 = scalar_lea.vmem [#allocation0], 143
    %s141 = smov 12
    %v142 = vld [vmem:[%s140] ss:$16 sm:%s141]
    %vm143 = vcmask 1043458
    %v144 = vsel %vm143, %v142, %v139
    %s145 = scalar_lea.vmem [#allocation0], 143
    %s146 = smov 48
    %v147 = vld [vmem:[%s145] ss:$16 sm:%s146]
    %vm148 = vcmask 1045508
    %v149 = vsel %vm148, %v147, %v144
    %s150 = scalar_lea.vmem [#allocation0], 143
    %s151 = smov 192
    %v152 = vld [vmem:[%s150] ss:$16 sm:%s151]
    %vm153 = vcmask 1047558
    %v154 = vsel %vm153, %v152, %v149
    %155 = vrot.lane.b32.xlu0 %v154, 112
    %v156 = vpop.permute.xlu0 %155
    %vm157 = vcmask 1048448
    %s158 = scalar_lea.vmem %s1, 24
    %159 = vst.msk [vmem:[%s158] sm:$0xff] %vm157, %v156
    %s160 = scalar_lea.vmem [#allocation0], 6
    %s161 = smov 3
    %v162 = vld [vmem:[%s160] ss:$16 sm:%s161]
    %s163 = scalar_lea.vmem [#allocation0], 6
    %s164 = smov 12
    %v165 = vld [vmem:[%s163] ss:$16 sm:%s164]
    %vm166 = vcmask 1043458
    %v167 = vsel %vm166, %v165, %v162
    %s168 = scalar_lea.vmem [#allocation0], 6
    %s169 = smov 48
    %v170 = vld [vmem:[%s168] ss:$16 sm:%s169]
    %vm171 = vcmask 1045508
    %v172 = vsel %vm171, %v170, %v167
    %s173 = scalar_lea.vmem [#allocation0], 6
    %s174 = smov 192
    %v175 = vld [vmem:[%s173] ss:$16 sm:%s174]
    %vm176 = vcmask 1047558
    %v177 = vsel %vm176, %v175, %v172
    %178 = vrot.lane.b32.xlu0 %v177, 96
    %v179 = vpop.permute.xlu0 %178
    %vm180 = vcmask 917248
    %181 = vst.msk [vmem:[%s1] sm:$0xff] %vm180, %v179
    %s182 = scalar_lea.vmem [#allocation0], 14
    %s183 = smov 3
    %v184 = vld [vmem:[%s182] ss:$16 sm:%s183]
    %s185 = scalar_lea.vmem [#allocation0], 14
    %s186 = smov 12
    %v187 = vld [vmem:[%s185] ss:$16 sm:%s186]
    %vm188 = vcmask 1043458
    %v189 = vsel %vm188, %v187, %v184
    %s190 = scalar_lea.vmem [#allocation0], 14
    %s191 = smov 48
    %v192 = vld [vmem:[%s190] ss:$16 sm:%s191]
    %vm193 = vcmask 1045508
    %v194 = vsel %vm193, %v192, %v189
    %s195 = scalar_lea.vmem [#allocation0], 14
    %s196 = smov 192
    %v197 = vld [vmem:[%s195] ss:$16 sm:%s196]
    %vm198 = vcmask 1047558
    %v199 = vsel %vm198, %v197, %v194
    %200 = vrot.lane.b32.xlu0 %v199, 96
    %v201 = vpop.permute.xlu0 %200
    %vm202 = vcmask 917248
    %s203 = scalar_lea.vmem %s1, 8
    %204 = vst.msk [vmem:[%s203] sm:$0xff] %vm202, %v201
    %s205 = scalar_lea.vmem [#allocation0], 134
    %s206 = smov 3
    %v207 = vld [vmem:[%s205] ss:$16 sm:%s206]
    %s208 = scalar_lea.vmem [#allocation0], 134
    %s209 = smov 12
    %v210 = vld [vmem:[%s208] ss:$16 sm:%s209]
    %vm211 = vcmask 1043458
    %v212 = vsel %vm211, %v210, %v207
    %s213 = scalar_lea.vmem [#allocation0], 134
    %s214 = smov 48
    %v215 = vld [vmem:[%s213] ss:$16 sm:%s214]
    %vm216 = vcmask 1045508
    %v217 = vsel %vm216, %v215, %v212
    %s218 = scalar_lea.vmem [#allocation0], 134
    %s219 = smov 192
    %v220 = vld [vmem:[%s218] ss:$16 sm:%s219]
    %vm221 = vcmask 1047558
    %v222 = vsel %vm221, %v220, %v217
    %223 = vrot.lane.b32.xlu0 %v222, 96
    %v224 = vpop.permute.xlu0 %223
    %vm225 = vcmask 917248
    %s226 = scalar_lea.vmem %s1, 16
    %227 = vst.msk [vmem:[%s226] sm:$0xff] %vm225, %v224
    %s228 = scalar_lea.vmem [#allocation0], 142
    %s229 = smov 3
    %v230 = vld [vmem:[%s228] ss:$16 sm:%s229]
    %s231 = scalar_lea.vmem [#allocation0], 142
    %s232 = smov 12
    %v233 = vld [vmem:[%s231] ss:$16 sm:%s232]
    %vm234 = vcmask 1043458
    %v235 = vsel %vm234, %v233, %v230
    %s236 = scalar_lea.vmem [#allocation0], 142
    %s237 = smov 48
    %v238 = vld [vmem:[%s236] ss:$16 sm:%s237]
    %vm239 = vcmask 1045508
    %v240 = vsel %vm239, %v238, %v235
    %s241 = scalar_lea.vmem [#allocation0], 142
    %s242 = smov 192
    %v243 = vld [vmem:[%s241] ss:$16 sm:%s242]
    %vm244 = vcmask 1047558
    %v245 = vsel %vm244, %v243, %v240
    %246 = vrot.lane.b32.xlu0 %v245, 96
    %v247 = vpop.permute.xlu0 %246
    %vm248 = vcmask 917248
    %s249 = scalar_lea.vmem %s1, 24
    %250 = vst.msk [vmem:[%s249] sm:$0xff] %vm248, %v247
    %s251 = scalar_lea.vmem [#allocation0], 5
    %s252 = smov 3
    %v253 = vld [vmem:[%s251] ss:$16 sm:%s252]
    %s254 = scalar_lea.vmem [#allocation0], 5
    %s255 = smov 12
    %v256 = vld [vmem:[%s254] ss:$16 sm:%s255]
    %vm257 = vcmask 1043458
    %v258 = vsel %vm257, %v256, %v253
    %s259 = scalar_lea.vmem [#allocation0], 5
    %s260 = smov 48
    %v261 = vld [vmem:[%s259] ss:$16 sm:%s260]
    %vm262 = vcmask 1045508
    %v263 = vsel %vm262, %v261, %v258
    %s264 = scalar_lea.vmem [#allocation0], 5
    %s265 = smov 192
    %v266 = vld [vmem:[%s264] ss:$16 sm:%s265]
    %vm267 = vcmask 1047558
    %v268 = vsel %vm267, %v266, %v263
    %269 = vrot.lane.b32.xlu0 %v268, 80
    %v270 = vpop.permute.xlu0 %269
    %vm271 = vcmask 786048
    %272 = vst.msk [vmem:[%s1] sm:$0xff] %vm271, %v270
    %s273 = scalar_lea.vmem [#allocation0], 13
    %s274 = smov 3
    %v275 = vld [vmem:[%s273] ss:$16 sm:%s274]
    %s276 = scalar_lea.vmem [#allocation0], 13
    %s277 = smov 12
    %v278 = vld [vmem:[%s276] ss:$16 sm:%s277]
    %vm279 = vcmask 1043458
    %v280 = vsel %vm279, %v278, %v275
    %s281 = scalar_lea.vmem [#allocation0], 13
    %s282 = smov 48
    %v283 = vld [vmem:[%s281] ss:$16 sm:%s282]
    %vm284 = vcmask 1045508
    %v285 = vsel %vm284, %v283, %v280
    %s286 = scalar_lea.vmem [#allocation0], 13
    %s287 = smov 192
    %v288 = vld [vmem:[%s286] ss:$16 sm:%s287]
    %vm289 = vcmask 1047558
    %v290 = vsel %vm289, %v288, %v285
    %291 = vrot.lane.b32.xlu0 %v290, 80
    %v292 = vpop.permute.xlu0 %291
    %vm293 = vcmask 786048
    %s294 = scalar_lea.vmem %s1, 8
    %295 = vst.msk [vmem:[%s294] sm:$0xff] %vm293, %v292
    %s296 = scalar_lea.vmem [#allocation0], 133
    %s297 = smov 3
    %v298 = vld [vmem:[%s296] ss:$16 sm:%s297]
    %s299 = scalar_lea.vmem [#allocation0], 133
    %s300 = smov 12
    %v301 = vld [vmem:[%s299] ss:$16 sm:%s300]
    %vm302 = vcmask 1043458
    %v303 = vsel %vm302, %v301, %v298
    %s304 = scalar_lea.vmem [#allocation0], 133
    %s305 = smov 48
    %v306 = vld [vmem:[%s304] ss:$16 sm:%s305]
    %vm307 = vcmask 1045508
    %v308 = vsel %vm307, %v306, %v303
    %s309 = scalar_lea.vmem [#allocation0], 133
    %s310 = smov 192
    %v311 = vld [vmem:[%s309] ss:$16 sm:%s310]
    %vm312 = vcmask 1047558
    %v313 = vsel %vm312, %v311, %v308
    %314 = vrot.lane.b32.xlu0 %v313, 80
    %v315 = vpop.permute.xlu0 %314
    %vm316 = vcmask 786048
    %s317 = scalar_lea.vmem %s1, 16
    %318 = vst.msk [vmem:[%s317] sm:$0xff] %vm316, %v315
    %s319 = scalar_lea.vmem [#allocation0], 141
    %s320 = smov 3
    %v321 = vld [vmem:[%s319] ss:$16 sm:%s320]
    %s322 = scalar_lea.vmem [#allocation0], 141
    %s323 = smov 12
    %v324 = vld [vmem:[%s322] ss:$16 sm:%s323]
    %vm325 = vcmask 1043458
    %v326 = vsel %vm325, %v324, %v321
    %s327 = scalar_lea.vmem [#allocation0], 141
    %s328 = smov 48
    %v329 = vld [vmem:[%s327] ss:$16 sm:%s328]
    %vm330 = vcmask 1045508
    %v331 = vsel %vm330, %v329, %v326
    %s332 = scalar_lea.vmem [#allocation0], 141
    %s333 = smov 192
    %v334 = vld [vmem:[%s332] ss:$16 sm:%s333]
    %vm335 = vcmask 1047558
    %v336 = vsel %vm335, %v334, %v331
    %337 = vrot.lane.b32.xlu0 %v336, 80
    %v338 = vpop.permute.xlu0 %337
    %vm339 = vcmask 786048
    %s340 = scalar_lea.vmem %s1, 24
    %341 = vst.msk [vmem:[%s340] sm:$0xff] %vm339, %v338
    %s342 = scalar_lea.vmem [#allocation0], 4
    %s343 = smov 3
    %v344 = vld [vmem:[%s342] ss:$16 sm:%s343]
    %s345 = scalar_lea.vmem [#allocation0], 4
    %s346 = smov 12
    %v347 = vld [vmem:[%s345] ss:$16 sm:%s346]
    %vm348 = vcmask 1043458
    %v349 = vsel %vm348, %v347, %v344
    %s350 = scalar_lea.vmem [#allocation0], 4
    %s351 = smov 48
    %v352 = vld [vmem:[%s350] ss:$16 sm:%s351]
    %vm353 = vcmask 1045508
    %v354 = vsel %vm353, %v352, %v349
    %s355 = scalar_lea.vmem [#allocation0], 4
    %s356 = smov 192
    %v357 = vld [vmem:[%s355] ss:$16 sm:%s356]
    %vm358 = vcmask 1047558
    %v359 = vsel %vm358, %v357, %v354
    %360 = vrot.lane.b32.xlu0 %v359, 64
    %v361 = vpop.permute.xlu0 %360
    %vm362 = vcmask 654848
    %363 = vst.msk [vmem:[%s1] sm:$0xff] %vm362, %v361
    %s364 = scalar_lea.vmem [#allocation0], 12
    %s365 = smov 3
    %v366 = vld [vmem:[%s364] ss:$16 sm:%s365]
    %s367 = scalar_lea.vmem [#allocation0], 12
    %s368 = smov 12
    %v369 = vld [vmem:[%s367] ss:$16 sm:%s368]
    %vm370 = vcmask 1043458
    %v371 = vsel %vm370, %v369, %v366
    %s372 = scalar_lea.vmem [#allocation0], 12
    %s373 = smov 48
    %v374 = vld [vmem:[%s372] ss:$16 sm:%s373]
    %vm375 = vcmask 1045508
    %v376 = vsel %vm375, %v374, %v371
    %s377 = scalar_lea.vmem [#allocation0], 12
    %s378 = smov 192
    %v379 = vld [vmem:[%s377] ss:$16 sm:%s378]
    %vm380 = vcmask 1047558
    %v381 = vsel %vm380, %v379, %v376
    %382 = vrot.lane.b32.xlu0 %v381, 64
    %v383 = vpop.permute.xlu0 %382
    %vm384 = vcmask 654848
    %s385 = scalar_lea.vmem %s1, 8
    %386 = vst.msk [vmem:[%s385] sm:$0xff] %vm384, %v383
    %s387 = scalar_lea.vmem [#allocation0], 132
    %s388 = smov 3
    %v389 = vld [vmem:[%s387] ss:$16 sm:%s388]
    %s390 = scalar_lea.vmem [#allocation0], 132
    %s391 = smov 12
    %v392 = vld [vmem:[%s390] ss:$16 sm:%s391]
    %vm393 = vcmask 1043458
    %v394 = vsel %vm393, %v392, %v389
    %s395 = scalar_lea.vmem [#allocation0], 132
    %s396 = smov 48
    %v397 = vld [vmem:[%s395] ss:$16 sm:%s396]
    %vm398 = vcmask 1045508
    %v399 = vsel %vm398, %v397, %v394
    %s400 = scalar_lea.vmem [#allocation0], 132
    %s401 = smov 192
    %v402 = vld [vmem:[%s400] ss:$16 sm:%s401]
    %vm403 = vcmask 1047558
    %v404 = vsel %vm403, %v402, %v399
    %405 = vrot.lane.b32.xlu0 %v404, 64
    %v406 = vpop.permute.xlu0 %405
    %vm407 = vcmask 654848
    %s408 = scalar_lea.vmem %s1, 16
    %409 = vst.msk [vmem:[%s408] sm:$0xff] %vm407, %v406
    %s410 = scalar_lea.vmem [#allocation0], 140
    %s411 = smov 3
    %v412 = vld [vmem:[%s410] ss:$16 sm:%s411]
    %s413 = scalar_lea.vmem [#allocation0], 140
    %s414 = smov 12
    %v415 = vld [vmem:[%s413] ss:$16 sm:%s414]
    %vm416 = vcmask 1043458
    %v417 = vsel %vm416, %v415, %v412
    %s418 = scalar_lea.vmem [#allocation0], 140
    %s419 = smov 48
    %v420 = vld [vmem:[%s418] ss:$16 sm:%s419]
    %vm421 = vcmask 1045508
    %v422 = vsel %vm421, %v420, %v417
    %s423 = scalar_lea.vmem [#allocation0], 140
    %s424 = smov 192
    %v425 = vld [vmem:[%s423] ss:$16 sm:%s424]
    %vm426 = vcmask 1047558
    %v427 = vsel %vm426, %v425, %v422
    %428 = vrot.lane.b32.xlu0 %v427, 64
    %v429 = vpop.permute.xlu0 %428
    %vm430 = vcmask 654848
    %s431 = scalar_lea.vmem %s1, 24
    %432 = vst.msk [vmem:[%s431] sm:$0xff] %vm430, %v429
    %s433 = scalar_lea.vmem [#allocation0], 3
    %s434 = smov 3
    %v435 = vld [vmem:[%s433] ss:$16 sm:%s434]
    %s436 = scalar_lea.vmem [#allocation0], 3
    %s437 = smov 12
    %v438 = vld [vmem:[%s436] ss:$16 sm:%s437]
    %vm439 = vcmask 1043458
    %v440 = vsel %vm439, %v438, %v435
    %s441 = scalar_lea.vmem [#allocation0], 3
    %s442 = smov 48
    %v443 = vld [vmem:[%s441] ss:$16 sm:%s442]
    %vm444 = vcmask 1045508
    %v445 = vsel %vm444, %v443, %v440
    %s446 = scalar_lea.vmem [#allocation0], 3
    %s447 = smov 192
    %v448 = vld [vmem:[%s446] ss:$16 sm:%s447]
    %vm449 = vcmask 1047558
    %v450 = vsel %vm449, %v448, %v445
    %451 = vrot.lane.b32.xlu0 %v450, 48
    %v452 = vpop.permute.xlu0 %451
    %vm453 = vcmask 523648
    %454 = vst.msk [vmem:[%s1] sm:$0xff] %vm453, %v452
    %s455 = scalar_lea.vmem [#allocation0], 11
    %s456 = smov 3
    %v457 = vld [vmem:[%s455] ss:$16 sm:%s456]
    %s458 = scalar_lea.vmem [#allocation0], 11
    %s459 = smov 12
    %v460 = vld [vmem:[%s458] ss:$16 sm:%s459]
    %vm461 = vcmask 1043458
    %v462 = vsel %vm461, %v460, %v457
    %s463 = scalar_lea.vmem [#allocation0], 11
    %s464 = smov 48
    %v465 = vld [vmem:[%s463] ss:$16 sm:%s464]
    %vm466 = vcmask 1045508
    %v467 = vsel %vm466, %v465, %v462
    %s468 = scalar_lea.vmem [#allocation0], 11
    %s469 = smov 192
    %v470 = vld [vmem:[%s468] ss:$16 sm:%s469]
    %vm471 = vcmask 1047558
    %v472 = vsel %vm471, %v470, %v467
    %473 = vrot.lane.b32.xlu0 %v472, 48
    %v474 = vpop.permute.xlu0 %473
    %vm475 = vcmask 523648
    %s476 = scalar_lea.vmem %s1, 8
    %477 = vst.msk [vmem:[%s476] sm:$0xff] %vm475, %v474
    %s478 = scalar_lea.vmem [#allocation0], 131
    %s479 = smov 3
    %v480 = vld [vmem:[%s478] ss:$16 sm:%s479]
    %s481 = scalar_lea.vmem [#allocation0], 131
    %s482 = smov 12
    %v483 = vld [vmem:[%s481] ss:$16 sm:%s482]
    %vm484 = vcmask 1043458
    %v485 = vsel %vm484, %v483, %v480
    %s486 = scalar_lea.vmem [#allocation0], 131
    %s487 = smov 48
    %v488 = vld [vmem:[%s486] ss:$16 sm:%s487]
    %vm489 = vcmask 1045508
    %v490 = vsel %vm489, %v488, %v485
    %s491 = scalar_lea.vmem [#allocation0], 131
    %s492 = smov 192
    %v493 = vld [vmem:[%s491] ss:$16 sm:%s492]
    %vm494 = vcmask 1047558
    %v495 = vsel %vm494, %v493, %v490
    %496 = vrot.lane.b32.xlu0 %v495, 48
    %v497 = vpop.permute.xlu0 %496
    %vm498 = vcmask 523648
    %s499 = scalar_lea.vmem %s1, 16
    %500 = vst.msk [vmem:[%s499] sm:$0xff] %vm498, %v497
    %s501 = scalar_lea.vmem [#allocation0], 139
    %s502 = smov 3
    %v503 = vld [vmem:[%s501] ss:$16 sm:%s502]
    %s504 = scalar_lea.vmem [#allocation0], 139
    %s505 = smov 12
    %v506 = vld [vmem:[%s504] ss:$16 sm:%s505]
    %vm507 = vcmask 1043458
    %v508 = vsel %vm507, %v506, %v503
    %s509 = scalar_lea.vmem [#allocation0], 139
    %s510 = smov 48
    %v511 = vld [vmem:[%s509] ss:$16 sm:%s510]
    %vm512 = vcmask 1045508
    %v513 = vsel %vm512, %v511, %v508
    %s514 = scalar_lea.vmem [#allocation0], 139
    %s515 = smov 192
    %v516 = vld [vmem:[%s514] ss:$16 sm:%s515]
    %vm517 = vcmask 1047558
    %v518 = vsel %vm517, %v516, %v513
    %519 = vrot.lane.b32.xlu0 %v518, 48
    %v520 = vpop.permute.xlu0 %519
    %vm521 = vcmask 523648
    %s522 = scalar_lea.vmem %s1, 24
    %523 = vst.msk [vmem:[%s522] sm:$0xff] %vm521, %v520
    %s524 = scalar_lea.vmem [#allocation0], 2
    %s525 = smov 3
    %v526 = vld [vmem:[%s524] ss:$16 sm:%s525]
    %s527 = scalar_lea.vmem [#allocation0], 2
    %s528 = smov 12
    %v529 = vld [vmem:[%s527] ss:$16 sm:%s528]
    %vm530 = vcmask 1043458
    %v531 = vsel %vm530, %v529, %v526
    %s532 = scalar_lea.vmem [#allocation0], 2
    %s533 = smov 48
    %v534 = vld [vmem:[%s532] ss:$16 sm:%s533]
    %vm535 = vcmask 1045508
    %v536 = vsel %vm535, %v534, %v531
    %s537 = scalar_lea.vmem [#allocation0], 2
    %s538 = smov 192
    %v539 = vld [vmem:[%s537] ss:$16 sm:%s538]
    %vm540 = vcmask 1047558
    %v541 = vsel %vm540, %v539, %v536
    %542 = vrot.lane.b32.xlu0 %v541, 32
    %v543 = vpop.permute.xlu0 %542
    %vm544 = vcmask 392448
    %545 = vst.msk [vmem:[%s1] sm:$0xff] %vm544, %v543
    %s546 = scalar_lea.vmem [#allocation0], 10
    %s547 = smov 3
    %v548 = vld [vmem:[%s546] ss:$16 sm:%s547]
    %s549 = scalar_lea.vmem [#allocation0], 10
    %s550 = smov 12
    %v551 = vld [vmem:[%s549] ss:$16 sm:%s550]
    %vm552 = vcmask 1043458
    %v553 = vsel %vm552, %v551, %v548
    %s554 = scalar_lea.vmem [#allocation0], 10
    %s555 = smov 48
    %v556 = vld [vmem:[%s554] ss:$16 sm:%s555]
    %vm557 = vcmask 1045508
    %v558 = vsel %vm557, %v556, %v553
    %s559 = scalar_lea.vmem [#allocation0], 10
    %s560 = smov 192
    %v561 = vld [vmem:[%s559] ss:$16 sm:%s560]
    %vm562 = vcmask 1047558
    %v563 = vsel %vm562, %v561, %v558
    %564 = vrot.lane.b32.xlu0 %v563, 32
    %v565 = vpop.permute.xlu0 %564
    %vm566 = vcmask 392448
    %s567 = scalar_lea.vmem %s1, 8
    %568 = vst.msk [vmem:[%s567] sm:$0xff] %vm566, %v565
    %s569 = scalar_lea.vmem [#allocation0], 130
    %s570 = smov 3
    %v571 = vld [vmem:[%s569] ss:$16 sm:%s570]
    %s572 = scalar_lea.vmem [#allocation0], 130
    %s573 = smov 12
    %v574 = vld [vmem:[%s572] ss:$16 sm:%s573]
    %vm575 = vcmask 1043458
    %v576 = vsel %vm575, %v574, %v571
    %s577 = scalar_lea.vmem [#allocation0], 130
    %s578 = smov 48
    %v579 = vld [vmem:[%s577] ss:$16 sm:%s578]
    %vm580 = vcmask 1045508
    %v581 = vsel %vm580, %v579, %v576
    %s582 = scalar_lea.vmem [#allocation0], 130
    %s583 = smov 192
    %v584 = vld [vmem:[%s582] ss:$16 sm:%s583]
    %vm585 = vcmask 1047558
    %v586 = vsel %vm585, %v584, %v581
    %587 = vrot.lane.b32.xlu0 %v586, 32
    %v588 = vpop.permute.xlu0 %587
    %vm589 = vcmask 392448
    %s590 = scalar_lea.vmem %s1, 16
    %591 = vst.msk [vmem:[%s590] sm:$0xff] %vm589, %v588
    %s592 = scalar_lea.vmem [#allocation0], 138
    %s593 = smov 3
    %v594 = vld [vmem:[%s592] ss:$16 sm:%s593]
    %s595 = scalar_lea.vmem [#allocation0], 138
    %s596 = smov 12
    %v597 = vld [vmem:[%s595] ss:$16 sm:%s596]
    %vm598 = vcmask 1043458
    %v599 = vsel %vm598, %v597, %v594
    %s600 = scalar_lea.vmem [#allocation0], 138
    %s601 = smov 48
    %v602 = vld [vmem:[%s600] ss:$16 sm:%s601]
    %vm603 = vcmask 1045508
    %v604 = vsel %vm603, %v602, %v599
    %s605 = scalar_lea.vmem [#allocation0], 138
    %s606 = smov 192
    %v607 = vld [vmem:[%s605] ss:$16 sm:%s606]
    %vm608 = vcmask 1047558
    %v609 = vsel %vm608, %v607, %v604
    %610 = vrot.lane.b32.xlu0 %v609, 32
    %v611 = vpop.permute.xlu0 %610
    %vm612 = vcmask 392448
    %s613 = scalar_lea.vmem %s1, 24
    %614 = vst.msk [vmem:[%s613] sm:$0xff] %vm612, %v611
    %s615 = scalar_lea.vmem [#allocation0], 1
    %s616 = smov 3
    %v617 = vld [vmem:[%s615] ss:$16 sm:%s616]
    %s618 = scalar_lea.vmem [#allocation0], 1
    %s619 = smov 12
    %v620 = vld [vmem:[%s618] ss:$16 sm:%s619]
    %vm621 = vcmask 1043458
    %v622 = vsel %vm621, %v620, %v617
    %s623 = scalar_lea.vmem [#allocation0], 1
    %s624 = smov 48
    %v625 = vld [vmem:[%s623] ss:$16 sm:%s624]
    %vm626 = vcmask 1045508
    %v627 = vsel %vm626, %v625, %v622
    %s628 = scalar_lea.vmem [#allocation0], 1
    %s629 = smov 192
    %v630 = vld [vmem:[%s628] ss:$16 sm:%s629]
    %vm631 = vcmask 1047558
    %v632 = vsel %vm631, %v630, %v627
    %633 = vrot.lane.b32.xlu0 %v632, 16
    %v634 = vpop.permute.xlu0 %633
    %vm635 = vcmask 261248
    %636 = vst.msk [vmem:[%s1] sm:$0xff] %vm635, %v634
    %s637 = scalar_lea.vmem [#allocation0], 9
    %s638 = smov 3
    %v639 = vld [vmem:[%s637] ss:$16 sm:%s638]
    %s640 = scalar_lea.vmem [#allocation0], 9
    %s641 = smov 12
    %v642 = vld [vmem:[%s640] ss:$16 sm:%s641]
    %vm643 = vcmask 1043458
    %v644 = vsel %vm643, %v642, %v639
    %s645 = scalar_lea.vmem [#allocation0], 9
    %s646 = smov 48
    %v647 = vld [vmem:[%s645] ss:$16 sm:%s646]
    %vm648 = vcmask 1045508
    %v649 = vsel %vm648, %v647, %v644
    %s650 = scalar_lea.vmem [#allocation0], 9
    %s651 = smov 192
    %v652 = vld [vmem:[%s650] ss:$16 sm:%s651]
    %vm653 = vcmask 1047558
    %v654 = vsel %vm653, %v652, %v649
    %655 = vrot.lane.b32.xlu0 %v654, 16
    %v656 = vpop.permute.xlu0 %655
    %vm657 = vcmask 261248
    %s658 = scalar_lea.vmem %s1, 8
    %659 = vst.msk [vmem:[%s658] sm:$0xff] %vm657, %v656
    %s660 = scalar_lea.vmem [#allocation0], 129
    %s661 = smov 3
    %v662 = vld [vmem:[%s660] ss:$16 sm:%s661]
    %s663 = scalar_lea.vmem [#allocation0], 129
    %s664 = smov 12
    %v665 = vld [vmem:[%s663] ss:$16 sm:%s664]
    %vm666 = vcmask 1043458
    %v667 = vsel %vm666, %v665, %v662
    %s668 = scalar_lea.vmem [#allocation0], 129
    %s669 = smov 48
    %v670 = vld [vmem:[%s668] ss:$16 sm:%s669]
    %vm671 = vcmask 1045508
    %v672 = vsel %vm671, %v670, %v667
    %s673 = scalar_lea.vmem [#allocation0], 129
    %s674 = smov 192
    %v675 = vld [vmem:[%s673] ss:$16 sm:%s674]
    %vm676 = vcmask 1047558
    %v677 = vsel %vm676, %v675, %v672
    %678 = vrot.lane.b32.xlu0 %v677, 16
    %v679 = vpop.permute.xlu0 %678
    %vm680 = vcmask 261248
    %s681 = scalar_lea.vmem %s1, 16
    %682 = vst.msk [vmem:[%s681] sm:$0xff] %vm680, %v679
    %s683 = scalar_lea.vmem [#allocation0], 137
    %s684 = smov 3
    %v685 = vld [vmem:[%s683] ss:$16 sm:%s684]
    %s686 = scalar_lea.vmem [#allocation0], 137
    %s687 = smov 12
    %v688 = vld [vmem:[%s686] ss:$16 sm:%s687]
    %vm689 = vcmask 1043458
    %v690 = vsel %vm689, %v688, %v685
    %s691 = scalar_lea.vmem [#allocation0], 137
    %s692 = smov 48
    %v693 = vld [vmem:[%s691] ss:$16 sm:%s692]
    %vm694 = vcmask 1045508
    %v695 = vsel %vm694, %v693, %v690
    %s696 = scalar_lea.vmem [#allocation0], 137
    %s697 = smov 192
    %v698 = vld [vmem:[%s696] ss:$16 sm:%s697]
    %vm699 = vcmask 1047558
    %v700 = vsel %vm699, %v698, %v695
    %701 = vrot.lane.b32.xlu0 %v700, 16
    %v702 = vpop.permute.xlu0 %701
    %vm703 = vcmask 261248
    %s704 = scalar_lea.vmem %s1, 24
    %705 = vst.msk [vmem:[%s704] sm:$0xff] %vm703, %v702
    %706 = vsyncpa [#allocation1], 1

// kernel: non_local_bb_forward.3
$region0: #{non_local_bb_forward.3}
  #allocation0 [shape = 'u32[]', space=smem, size = 0x4, offset = 0x4, fixed_abs, tag = 'smem constant byte address 0x4 - core index']
  #allocation1 [shape = 'u32[144,128]{1,0:T(1,128)}', space=vmem, size = 0x12000, scoped, tag = 'internal scratch']
  %s0 = inlined_call_operand.vmem [shape: f32[19,256], index: 0, kind: input, shape index: {}]
  %s1 = inlined_call_operand.vmem [shape: f32[16,19], index: 1, kind: input, shape index: {}]
  %s2 = inlined_call_operand.vmem [shape: f32[16,1], index: 2, kind: input, shape index: {}]
  %s3 = inlined_call_operand.vmem [shape: f32[16,256], index: 3, kind: output, shape index: {}]
  %s4 = sld [smem:[#allocation0]]
  $region117: #{non_local_bb_forward.3} parent=0
    _
  %s6 = ssub.s32 1, %s4
  %s7 = scalar_select 0, %s6, %s4
  $region1: #{non_local_bb_forward.3} parent=0
    #allocation2 [shape = 'u8[24576]{0}', space=vmem, size = 0x6000, scoped, tag = 'input window, operand 0']
    #allocation3 [shape = 'u8[16384]{0}', space=vmem, size = 0x4000, scoped, tag = 'output window, operand 0']
    loop: start=0, step=1, limit=4
    $region2: #{non_local_bb_forward.3} parent=1 // loop_pre_header
      _
    $region3: #{non_local_bb_forward.3} parent=1 // loop_header
      %s9 = sphi 0, %s13
      %p10 = scmp.ge.s32.totalorder %s9, 4
      %s19 = sphi 0, %s21
      %s22 = sphi 0, %s19
      %s23 = sphi 0, %s22
      %s39 = sphi 0, %s23
      %s43 = sphi 0, %s43
      %s45 = sphi 0, %s43
      %s46 = sphi 0, %s45
      %s60 = sphi 0, %s46
      %s64 = sphi 0, %s64
      %s66 = sphi 0, %s64
      %s67 = sphi 0, %s66
      %s81 = sphi 0, %s67
      %s87 = sphi 0, %s89
      %s90 = sphi 0, %s87
      %s91 = sphi 0, %s90
      %s107 = sphi 0, %s91
    $region4: #{non_local_bb_forward.3} parent=1 // loop_header_branch
      %12 = sbr.rel (%p10) target = $region8
    $region5: #{non_local_bb_forward.3} parent=1 // loop_body
      %s14 = ssub.s32 %s9, 1
      %s15 = ssub.s32 %s9, 2
      %s16 = sadd.s32 %s9, 1
      %s17 = ssub.s32 %s9, %s16
      %p18 = scmp.eq.s32.totalorder %s17, 0
      %s20 = sadd.s32 %s19, 1
      %s21 = scalar_select %p18, %s19, %s20
      %p24 = pneg %p18
      %p25 = scmp.eq.s32.totalorder %s9, 1
      %p26 = por %p24, %p25
      %p27 = scmp.ne.s32.totalorder %s19, %s22
      %p28 = scmp.eq.s32.totalorder %s9, 0
      %p29 = por %p27, %p28
      %p30 = scmp.ne.s32.totalorder %s19, %s22
      %p31 = scmp.eq.s32.totalorder %s14, 1
      %p32 = por %p30, %p31
      %p33 = scmp.ne.s32.totalorder %s22, %s23
      %p34 = scmp.eq.s32.totalorder %s14, 0
      %p35 = por %p33, %p34
      %p36 = scmp.ne.s32.totalorder %s22, %s23
      %p37 = scmp.eq.s32.totalorder %s15, 1
      %p38 = por %p36, %p37
      %p40 = scmp.ne.s32.totalorder %s23, %s39
      %p41 = scmp.eq.s32.totalorder %s15, 0
      %p42 = por %p40, %p41
      %s44 = sadd.s32 %s43, 1
      %p47 = scmp.eq.s32.totalorder %s9, 1
      %p48 = scmp.ne.s32.totalorder %s43, %s45
      %p49 = scmp.eq.s32.totalorder %s9, 0
      %p50 = por %p48, %p49
      %p51 = scmp.ne.s32.totalorder %s43, %s45
      %p52 = scmp.eq.s32.totalorder %s14, 1
      %p53 = por %p51, %p52
      %p54 = scmp.ne.s32.totalorder %s45, %s46
      %p55 = scmp.eq.s32.totalorder %s14, 0
      %p56 = por %p54, %p55
      %p57 = scmp.ne.s32.totalorder %s45, %s46
      %p58 = scmp.eq.s32.totalorder %s15, 1
      %p59 = por %p57, %p58
      %p61 = scmp.ne.s32.totalorder %s46, %s60
      %p62 = scmp.eq.s32.totalorder %s15, 0
      %p63 = por %p61, %p62
      %s65 = sadd.s32 %s64, 1
      %p68 = scmp.eq.s32.totalorder %s9, 1
      %p69 = scmp.ne.s32.totalorder %s64, %s66
      %p70 = scmp.eq.s32.totalorder %s9, 0
      %p71 = por %p69, %p70
      %p72 = scmp.ne.s32.totalorder %s64, %s66
      %p73 = scmp.eq.s32.totalorder %s14, 1
      %p74 = por %p72, %p73
      %p75 = scmp.ne.s32.totalorder %s66, %s67
      %p76 = scmp.eq.s32.totalorder %s14, 0
      %p77 = por %p75, %p76
      %p78 = scmp.ne.s32.totalorder %s66, %s67
      %p79 = scmp.eq.s32.totalorder %s15, 1
      %p80 = por %p78, %p79
      %p82 = scmp.ne.s32.totalorder %s67, %s81
      %p83 = scmp.eq.s32.totalorder %s15, 0
      %p84 = por %p82, %p83
      %s85 = ssub.s32 %s9, %s16
      %p86 = scmp.eq.s32.totalorder %s85, 0
      %s88 = sadd.s32 %s87, 1
      %s89 = scalar_select %p86, %s87, %s88
      %p92 = pneg %p86
      %p93 = scmp.eq.s32.totalorder %s9, 1
      %p94 = por %p92, %p93
      %p95 = scmp.ne.s32.totalorder %s87, %s90
      %p96 = scmp.eq.s32.totalorder %s9, 0
      %p97 = por %p95, %p96
      %p98 = scmp.ne.s32.totalorder %s87, %s90
      %p99 = scmp.eq.s32.totalorder %s14, 1
      %p100 = por %p98, %p99
      %p101 = scmp.ne.s32.totalorder %s90, %s91
      %p102 = scmp.eq.s32.totalorder %s14, 0
      %p103 = por %p101, %p102
      %p104 = scmp.ne.s32.totalorder %s90, %s91
      %p105 = scmp.eq.s32.totalorder %s15, 1
      %p106 = por %p104, %p105
      %p108 = scmp.ne.s32.totalorder %s91, %s107
      %p109 = scmp.eq.s32.totalorder %s15, 0
      %p110 = por %p108, %p109
      %p111 = scmp.le.s32.totalorder 1, %s9
      %p112 = scmp.lt.s32.totalorder %s9, 3
      %p113 = pnand %p111, %p112
      %p114 = pneg %p113
      // Predicated region
      $region9: #{non_local_bb_forward.3} parent=5 // pred_check
        _
      $region10: #{non_local_bb_forward.3} parent=5 // pred_check_branch
        %116 = sbr.rel (%p113) target = $region12
      $region11: #{non_local_bb_forward.3} parent=5 // pred_region
        %s117 = ssub.s32 %s9, 1
        // Predicated region
        $region13: #{non_local_bb_forward.3} parent=11 // pred_check
          %p118 = pneg %p56
        $region14: #{non_local_bb_forward.3} parent=11 // pred_check_branch
          %120 = sbr.rel (%p118) target = $region16
        $region15: #{non_local_bb_forward.3} parent=11 // pred_region
          _
        $region16: #{non_local_bb_forward.3} parent=11 // pred_fallthru
          _
        // Predicated region
        $region17: #{non_local_bb_forward.3} parent=11 // pred_check
          %p121 = pneg %p77
        $region18: #{non_local_bb_forward.3} parent=11 // pred_check_branch
          %123 = sbr.rel (%p121) target = $region20
        $region19: #{non_local_bb_forward.3} parent=11 // pred_region
          _
        $region20: #{non_local_bb_forward.3} parent=11 // pred_fallthru
          _
      $region12: #{non_local_bb_forward.3} parent=5 // pred_fallthru
        _
      %p124 = scmp.lt.s32.totalorder %s9, 2
      // Predicated region
      $region21: #{non_local_bb_forward.3} parent=5 // pred_check
        %p125 = pneg %p124
      $region22: #{non_local_bb_forward.3} parent=5 // pred_check_branch
        %127 = sbr.rel (%p125) target = $region24
      $region23: #{non_local_bb_forward.3} parent=5 // pred_region
        // Predicated region
        $region25: #{non_local_bb_forward.3} parent=23 // pred_check
          %p128 = pneg %p29
        $region26: #{non_local_bb_forward.3} parent=23 // pred_check_branch
          %130 = sbr.rel (%p128) target = $region28
        $region27: #{non_local_bb_forward.3} parent=23 // pred_region
          %s131 = sand.u32 %s19, 1
          %s132 = sand.u32 %s19, 1
          %s133 = smul.addr %s132, 24
          %s134 = scalar_lea.vmem [#allocation2], %s133
          %s135 = smul.addr %s9, 8
          %s136 = scalar_lea.vmem %s0, %s135
          // Predicated region
          $region29: #{non_local_bb_forward.3} parent=27 // pred_check
            _
          $region30: #{non_local_bb_forward.3} parent=27 // pred_check_branch
            %138 = sbr.rel (0) target = $region32
          $region31: #{non_local_bb_forward.3} parent=27 // pred_region
            // Predicated region
            $region33: #{non_local_bb_forward.3} parent=31 // pred_check
              _
            $region34: #{non_local_bb_forward.3} parent=31 // pred_check_branch
              %140 = sbr.rel (0) target = $region36
            $region35: #{non_local_bb_forward.3} parent=31 // pred_region
              // Predicated region
              $region48: #{non_local_bb_forward.3} parent=35 // pred_check
                _
              $region49: #{non_local_bb_forward.3} parent=35 // pred_check_branch
                %159 = sbr.rel (0) target = $region51
              $region50: #{non_local_bb_forward.3} parent=35 // pred_region
                loop: start=0, step=1, limit=1
                $region52: #{non_local_bb_forward.3} parent=50 // loop_pre_header
                  _
                $region53: #{non_local_bb_forward.3} parent=50 // loop_header
                  %s161 = sphi 0, %s165
                  %p162 = scmp.ge.s32.totalorder %s161, 1
                  %s166 = sphi %s136, %s136
                  %s167 = sphi %s134, %s134
                $region54: #{non_local_bb_forward.3} parent=50 // loop_header_branch
                  %164 = sbr.rel (%p162) target = $region58
                $region55: #{non_local_bb_forward.3} parent=50 // loop_body
                  %v168 = vld [vmem:[%s166] sm:$0xff]
                  %169 = vst [vmem:[%s167] sm:$0xff] %v168
                  %v170 = vld [vmem:[%s166 + $0x10] sm:$0xff]
                  %171 = vst [vmem:[%s167 + $0x8] sm:$0xff] %v170
                  %v172 = vld [vmem:[%s166 + $0x20] sm:$0xff]
                  %173 = vst [vmem:[%s167 + $0x10] sm:$0xff] %v172
                $region56: #{non_local_bb_forward.3} parent=50 // loop_footer
                  %s165 = sadd.s32 1, %s161
                $region57: #{non_local_bb_forward.3} parent=50 // loop_footer_branch
                  %160 = sbr.rel target = $region53
                $region58: #{non_local_bb_forward.3} parent=50 // loop_exit
                  _
              $region51: #{non_local_bb_forward.3} parent=35 // pred_fallthru
                _
              // Predicated region
              $region59: #{non_local_bb_forward.3} parent=35 // pred_check
                _
              $region60: #{non_local_bb_forward.3} parent=35 // pred_check_branch
                %175 = sbr.rel target = $region62
              $region61: #{non_local_bb_forward.3} parent=35 // pred_region
                _
              $region62: #{non_local_bb_forward.3} parent=35 // pred_fallthru
                _
            $region36: #{non_local_bb_forward.3} parent=31 // pred_fallthru
              _
            // Predicated region
            $region37: #{non_local_bb_forward.3} parent=31 // pred_check
              _
            $region38: #{non_local_bb_forward.3} parent=31 // pred_check_branch
              %142 = sbr.rel target = $region40
            $region39: #{non_local_bb_forward.3} parent=31 // pred_region
              loop: start=0, step=1, limit=1
              $region41: #{non_local_bb_forward.3} parent=39 // loop_pre_header
                _
              $region42: #{non_local_bb_forward.3} parent=39 // loop_header
                %s145 = sphi 0, %s149
                %p146 = scmp.ge.s32.totalorder %s145, 1
                %s150 = sphi %s136, %s136
                %s151 = sphi %s134, %s134
              $region43: #{non_local_bb_forward.3} parent=39 // loop_header_branch
                %148 = sbr.rel (%p146) target = $region47
              $region44: #{non_local_bb_forward.3} parent=39 // loop_body
                %v152 = vld [vmem:[%s150] sm:$0xff]
                %153 = vst [vmem:[%s151] sm:$0xff] %v152
                %v154 = vld [vmem:[%s150 + $0x10] sm:$0xff]
                %155 = vst [vmem:[%s151 + $0x8] sm:$0xff] %v154
                %v156 = vld [vmem:[%s150 + $0x20] sm:$0xff]
                %157 = vst [vmem:[%s151 + $0x10] sm:$0xff] %v156
              $region45: #{non_local_bb_forward.3} parent=39 // loop_footer
                %s149 = sadd.s32 1, %s145
              $region46: #{non_local_bb_forward.3} parent=39 // loop_footer_branch
                %144 = sbr.rel target = $region42
              $region47: #{non_local_bb_forward.3} parent=39 // loop_exit
                _
            $region40: #{non_local_bb_forward.3} parent=31 // pred_fallthru
              _
          $region32: #{non_local_bb_forward.3} parent=27 // pred_fallthru
            _
          %176 = vnop
        $region28: #{non_local_bb_forward.3} parent=23 // pred_fallthru
          _
      $region24: #{non_local_bb_forward.3} parent=5 // pred_fallthru
        _
      %p177 = scmp.le.s32.totalorder 1, %s9
      %p178 = scmp.lt.s32.totalorder %s9, 3
      %p179 = pnand %p177, %p178
      %p180 = pneg %p179
      // Predicated region
      $region63: #{non_local_bb_forward.3} parent=5 // pred_check
        _
      $region64: #{non_local_bb_forward.3} parent=5 // pred_check_branch
        %182 = sbr.rel (%p179) target = $region66
      $region65: #{non_local_bb_forward.3} parent=5 // pred_region
        %s183 = ssub.s32 %s9, 1
        %s184 = sand.u32 %s22, 1
        %s185 = sand.u32 %s22, 1
        %s186 = smul.addr %s185, 24
        %s187 = scalar_lea.vmem [#allocation2], %s186
        // Predicated region
        $region67: #{non_local_bb_forward.3} parent=65 // pred_check
          %p188 = pneg %p35
        $region68: #{non_local_bb_forward.3} parent=65 // pred_check_branch
          %190 = sbr.rel (%p188) target = $region70
        $region69: #{non_local_bb_forward.3} parent=65 // pred_region
          _
        $region70: #{non_local_bb_forward.3} parent=65 // pred_fallthru
          _
        %s191 = sand.u32 %s22, 1
        %s192 = sand.u32 %s22, 1
        %s193 = smul.addr %s192, 24
        %s194 = scalar_lea.vmem [#allocation2], %s193
        %p195 = pneg %p35
        %p196 = pneg %p32
        %p197 = pneg %p56
        %p198 = pneg %p53
        %p199 = pneg %p77
        %p200 = pneg %p74
        %p201 = pneg %p103
        %p202 = pneg %p100
        %s203 = sand.u32 %s90, 1
        %s204 = sand.u32 %s90, 1
        %s205 = smul.addr %s204, 16
        %s206 = scalar_lea.vmem [#allocation3], %s205
        %v207 = vld [vmem:[%s1] sm:$0xff]
        %v208 = vld [vmem:[%s1 + $0x8] sm:$0xff]
        %v209 = vld [vmem:[%s187] sm:$0xff]
        %v210 = vld [vmem:[%s187 + $0x8] sm:$0xff]
        %v211 = vld [vmem:[%s187 + $0x10] sm:$0x7]
        %v212 = vld [vmem:[%s2] sm:$0xff]
        %v213 = vld [vmem:[%s2 + $0x8] sm:$0xff]
        %215 = vset.pattern.permute.xlu0 0
        %216 = vperm.xlu0 %215, %v212
        %v217 = vpop.permute.xlu0 %216
        %220 = vset.pattern.permute.xlu0 0
        %221 = vperm.xlu0 %220, %v213
        %v222 = vpop.permute.xlu0 %221
        %vm224 = vcmask 154624
        %v226 = vsel %vm224, %v207, 0
        %v229 = vsel %vm224, %v208, 0
        %vm231 = vcmask 1042432
        %v233 = vsel %vm231, %v211, 0
        %235 = vmatprep.subr.mxu0 0.0
        %236 = vmatpush1.msra.mxu0 %v209
        %237 = vmatprep.subr.mxu0 0.0
        %238 = vmatpush1.msra.mxu0 %v210
        %239 = vmatprep.subr.mxu0 0.0
        %240 = vmatpush1.msra.mxu0 %v233
        %241 = vmatprep.subr.mxu0 0.0
        %242 = vmatpush1.msra.mxu0 0.0
        %243 = vmatprep.subr.mxu0 0.0
        %244 = vmatpush1.msra.mxu0 0.0
        %245 = vmatprep.subr.mxu0 0.0
        %246 = vmatpush1.msra.mxu0 0.0
        %247 = vmatprep.subr.mxu0 0.0
        %248 = vmatpush1.msra.mxu0 0.0
        %249 = vmatprep.subr.mxu0 0.0
        %250 = vmatpush1.msra.mxu0 0.0
        %251 = vmatprep.subr.mxu0 0.0
        %252 = vmatpush1.msra.mxu0 0.0
        %253 = vmatprep.subr.mxu0 0.0
        %254 = vmatpush1.msra.mxu0 0.0
        %255 = vmatprep.subr.mxu0 0.0
        %256 = vmatpush1.msra.mxu0 0.0
        %257 = vmatprep.subr.mxu0 0.0
        %258 = vmatpush1.msra.mxu0 0.0
        %259 = vmatprep.subr.mxu0 0.0
        %260 = vmatpush1.msra.mxu0 0.0
        %261 = vmatprep.subr.mxu0 0.0
        %262 = vmatpush1.msra.mxu0 0.0
        %263 = vmatprep.subr.mxu0 0.0
        %264 = vmatpush1.msra.mxu0 0.0
        %265 = vmatprep.subr.mxu0 0.0
        %266 = vmatpush1.msra.mxu0 0.0
        %267 = vmatprep.subr.mxu0 0.0
        %268 = vmatpush1.msra.mxu0 0.0
        %269 = vmatprep.subr.mxu0 0.0
        %270 = vmatpush1.msra.mxu0 0.0
        %271 = vmatprep.subr.mxu0 0.0
        %272 = vmatpush1.msra.mxu0 0.0
        %273 = vmatprep.subr.mxu0 0.0
        %274 = vmatpush1.msra.mxu0 0.0
        %275 = vmatprep.subr.mxu0 0.0
        %276 = vmatpush1.msra.mxu0 0.0
        %277 = vmatprep.subr.mxu0 0.0
        %278 = vmatpush1.msra.mxu0 0.0
        %279 = vmatprep.subr.mxu0 0.0
        %280 = vmatpush1.msra.mxu0 0.0
        %281 = vmatprep.subr.mxu0 0.0
        %282 = vmatpush1.msra.mxu0 0.0
        %283 = vmatprep.subr.mxu0 0.0
        %284 = vmatpush1.msra.mxu0 0.0
        %285 = vmatprep.subr.mxu0 0.0
        %286 = vmatpush1.msra.mxu0 0.0
        %287 = vmatprep.subr.mxu0 0.0
        %288 = vmatpush1.msra.mxu0 0.0
        %289 = vmatprep.subr.mxu0 0.0
        %290 = vmatpush1.msra.mxu0 0.0
        %291 = vmatprep.subr.mxu0 0.0
        %292 = vmatpush1.msra.mxu0 0.0
        %293 = vmatprep.subr.mxu0 0.0
        %294 = vmatpush1.msra.mxu0 0.0
        %295 = vmatprep.subr.mxu0 0.0
        %296 = vmatpush1.msra.mxu0 0.0
        %297 = vmatprep.subr.mxu0 0.0
        %298 = vmatpush1.msra.mxu0 0.0
        %299 = vmatprep.mubr.f32.mxu0 0.0
        %300 = vmatmul.mubr.f32.gmra.mrb[0].mxu0 %v226
        %v301 = vpop.f32.mrb[0].mxu0
        %v302 = vadd.f32 %v217, %v301
        %v303 = vpop.f32.mrb[0].mxu0
        %304 = vmatprep.mubr.f32.mxu0 0.0
        %305 = vmatmul.mubr.f32.gmra.mrb[0].mxu0 %v229
        %v306 = vpop.f32.mrb[0].mxu0
        %v307 = vadd.f32 %v222, %v306
        %v308 = vpop.f32.mrb[0].mxu0
        %309 = vdwg.mxu0
        %310 = vst [vmem:[%s206] sm:$0xff] %v302
        %311 = vst [vmem:[%s206 + $0x8] sm:$0xff] %v307
        %s312 = sand.u32 %s90, 1
        %s313 = sand.u32 %s90, 1
        %s314 = smul.addr %s313, 16
        %s315 = scalar_lea.vmem [#allocation3], %s314
        // Predicated region
        $region71: #{non_local_bb_forward.3} parent=65 // pred_check
          %p316 = pneg %p100
        $region72: #{non_local_bb_forward.3} parent=65 // pred_check_branch
          %318 = sbr.rel (%p316) target = $region74
        $region73: #{non_local_bb_forward.3} parent=65 // pred_region
          %s319 = smul.addr %s14, 8
          %s320 = scalar_lea.vmem %s3, %s319
          // Predicated region
          $region75: #{non_local_bb_forward.3} parent=73 // pred_check
            _
          $region76: #{non_local_bb_forward.3} parent=73 // pred_check_branch
            %322 = sbr.rel (0) target = $region78
          $region77: #{non_local_bb_forward.3} parent=73 // pred_region
            // Predicated region
            $region79: #{non_local_bb_forward.3} parent=77 // pred_check
              _
            $region80: #{non_local_bb_forward.3} parent=77 // pred_check_branch
              %324 = sbr.rel (0) target = $region82
            $region81: #{non_local_bb_forward.3} parent=77 // pred_region
              // Predicated region
              $region94: #{non_local_bb_forward.3} parent=81 // pred_check
                _
              $region95: #{non_local_bb_forward.3} parent=81 // pred_check_branch
                %341 = sbr.rel (0) target = $region97
              $region96: #{non_local_bb_forward.3} parent=81 // pred_region
                loop: start=0, step=1, limit=1
                $region98: #{non_local_bb_forward.3} parent=96 // loop_pre_header
                  _
                $region99: #{non_local_bb_forward.3} parent=96 // loop_header
                  %s343 = sphi 0, %s347
                  %p344 = scmp.ge.s32.totalorder %s343, 1
                  %s348 = sphi %s315, %s315
                  %s349 = sphi %s320, %s320
                $region100: #{non_local_bb_forward.3} parent=96 // loop_header_branch
                  %346 = sbr.rel (%p344) target = $region104
                $region101: #{non_local_bb_forward.3} parent=96 // loop_body
                  %v350 = vld [vmem:[%s348] sm:$0xff]
                  %351 = vst [vmem:[%s349] sm:$0xff] %v350
                  %v352 = vld [vmem:[%s348 + $0x8] sm:$0xff]
                  %353 = vst [vmem:[%s349 + $0x10] sm:$0xff] %v352
                $region102: #{non_local_bb_forward.3} parent=96 // loop_footer
                  %s347 = sadd.s32 1, %s343
                $region103: #{non_local_bb_forward.3} parent=96 // loop_footer_branch
                  %342 = sbr.rel target = $region99
                $region104: #{non_local_bb_forward.3} parent=96 // loop_exit
                  _
              $region97: #{non_local_bb_forward.3} parent=81 // pred_fallthru
                _
              // Predicated region
              $region105: #{non_local_bb_forward.3} parent=81 // pred_check
                _
              $region106: #{non_local_bb_forward.3} parent=81 // pred_check_branch
                %355 = sbr.rel target = $region108
              $region107: #{non_local_bb_forward.3} parent=81 // pred_region
                _
              $region108: #{non_local_bb_forward.3} parent=81 // pred_fallthru
                _
            $region82: #{non_local_bb_forward.3} parent=77 // pred_fallthru
              _
            // Predicated region
            $region83: #{non_local_bb_forward.3} parent=77 // pred_check
              _
            $region84: #{non_local_bb_forward.3} parent=77 // pred_check_branch
              %326 = sbr.rel target = $region86
            $region85: #{non_local_bb_forward.3} parent=77 // pred_region
              loop: start=0, step=1, limit=1
              $region87: #{non_local_bb_forward.3} parent=85 // loop_pre_header
                _
              $region88: #{non_local_bb_forward.3} parent=85 // loop_header
                %s329 = sphi 0, %s333
                %p330 = scmp.ge.s32.totalorder %s329, 1
                %s334 = sphi %s315, %s315
                %s335 = sphi %s320, %s320
              $region89: #{non_local_bb_forward.3} parent=85 // loop_header_branch
                %332 = sbr.rel (%p330) target = $region93
              $region90: #{non_local_bb_forward.3} parent=85 // loop_body
                %v336 = vld [vmem:[%s334] sm:$0xff]
                %337 = vst [vmem:[%s335] sm:$0xff] %v336
                %v338 = vld [vmem:[%s334 + $0x8] sm:$0xff]
                %339 = vst [vmem:[%s335 + $0x10] sm:$0xff] %v338
              $region91: #{non_local_bb_forward.3} parent=85 // loop_footer
                %s333 = sadd.s32 1, %s329
              $region92: #{non_local_bb_forward.3} parent=85 // loop_footer_branch
                %328 = sbr.rel target = $region88
              $region93: #{non_local_bb_forward.3} parent=85 // loop_exit
                _
            $region86: #{non_local_bb_forward.3} parent=77 // pred_fallthru
              _
          $region78: #{non_local_bb_forward.3} parent=73 // pred_fallthru
            _
          %356 = vnop
        $region74: #{non_local_bb_forward.3} parent=65 // pred_fallthru
          _
      $region66: #{non_local_bb_forward.3} parent=5 // pred_fallthru
        _
      %p357 = scmp.le.s32.totalorder 2, %s9
      // Predicated region
      $region109: #{non_local_bb_forward.3} parent=5 // pred_check
        %p358 = pneg %p357
      $region110: #{non_local_bb_forward.3} parent=5 // pred_check_branch
        %360 = sbr.rel (%p358) target = $region112
      $region111: #{non_local_bb_forward.3} parent=5 // pred_region
        %s361 = ssub.s32 %s9, 2
        // Predicated region
        $region113: #{non_local_bb_forward.3} parent=111 // pred_check
          %p362 = pneg %p106
        $region114: #{non_local_bb_forward.3} parent=111 // pred_check_branch
          %364 = sbr.rel (%p362) target = $region116
        $region115: #{non_local_bb_forward.3} parent=111 // pred_region
          %s365 = sand.u32 %s91, 1
          %s366 = sand.u32 %s91, 1
          %s367 = smul.addr %s366, 16
          %s368 = scalar_lea.vmem [#allocation3], %s367
        $region116: #{non_local_bb_forward.3} parent=111 // pred_fallthru
          _
      $region112: #{non_local_bb_forward.3} parent=5 // pred_fallthru
        _
    $region6: #{non_local_bb_forward.3} parent=1 // loop_footer
      %s13 = sadd.s32 1, %s9
    $region7: #{non_local_bb_forward.3} parent=1 // loop_footer_branch
      %8 = sbr.rel target = $region3
    $region8: #{non_local_bb_forward.3} parent=1 // loop_exit
      _

// kernel: non_local_bb_forward.2
$region0: #{non_local_bb_forward.2}
  #allocation0 [shape = 'u32[]', space=smem, size = 0x4, offset = 0x4, fixed_abs, tag = 'smem constant byte address 0x4 - core index']
  #allocation1 [shape = 'u32[144,128]{1,0:T(1,128)}', space=vmem, size = 0x12000, scoped, tag = 'internal scratch']
  #allocation2 [shape = 'f32[8,8]{1,0:T(8,128)}', space=vmem, size = 0x1000, scoped, tag = 'scratch operand']
  %s0 = inlined_call_operand.vmem [shape: f32[19,256], index: 0, kind: input, shape index: {}]
  %s1 = inlined_call_operand.vmem [shape: f32[16,19], index: 1, kind: input, shape index: {}]
  %s2 = inlined_call_operand.vmem [shape: f32[16,1], index: 2, kind: input, shape index: {}]
  %s3 = inlined_call_operand.vmem [shape: f32[8,19], index: 3, kind: input, shape index: {}]
  %s4 = inlined_call_operand.vmem [shape: f32[1,8], index: 4, kind: input, shape index: {}]
  %s5 = inlined_call_operand.vmem [shape: f32[16,8], index: 5, kind: input, shape index: {}]
  %s6 = inlined_call_operand.vmem [shape: f32[16,1], index: 6, kind: input, shape index: {}]
  %s7 = inlined_call_operand.vmem [shape: f32[16,19], index: 7, kind: input, shape index: {}]
  %s8 = inlined_call_operand.vmem [shape: f32[16,19], index: 8, kind: output, shape index: {0}]
  %s9 = inlined_call_operand.vmem [shape: f32[16,1], index: 9, kind: output, shape index: {1}]
  %10 = xla_tuple %s8, %s9
  %s11 = sld [smem:[#allocation0]]
  $region119: #{non_local_bb_forward.2} parent=0
    _
  %s13 = ssub.s32 1, %s11
  %s14 = scalar_select 0, %s13, %s11
  $region1: #{non_local_bb_forward.2} parent=0
    #allocation3 [shape = 'u8[24576]{0}', space=vmem, size = 0x6000, scoped, tag = 'input window, operand 0']
    loop: start=0, step=1, limit=4
    $region2: #{non_local_bb_forward.2} parent=1 // loop_pre_header
      _
    $region3: #{non_local_bb_forward.2} parent=1 // loop_header
      %s16 = sphi 0, %s20
      %p17 = scmp.ge.s32.totalorder %s16, 4
      %s26 = sphi 0, %s28
      %s29 = sphi 0, %s26
      %s30 = sphi 0, %s29
      %s46 = sphi 0, %s30
      %s50 = sphi 0, %s50
      %s52 = sphi 0, %s50
      %s53 = sphi 0, %s52
      %s67 = sphi 0, %s53
      %s71 = sphi 0, %s71
      %s73 = sphi 0, %s71
      %s74 = sphi 0, %s73
      %s88 = sphi 0, %s74
      %s92 = sphi 0, %s92
      %s94 = sphi 0, %s92
      %s95 = sphi 0, %s94
      %s109 = sphi 0, %s95
      %s113 = sphi 0, %s113
      %s115 = sphi 0, %s113
      %s116 = sphi 0, %s115
      %s130 = sphi 0, %s116
      %s134 = sphi 0, %s134
      %s136 = sphi 0, %s134
      %s137 = sphi 0, %s136
      %s151 = sphi 0, %s137
      %s155 = sphi 0, %s155
      %s157 = sphi 0, %s155
      %s158 = sphi 0, %s157
      %s172 = sphi 0, %s158
      %s176 = sphi 0, %s176
      %s178 = sphi 0, %s176
      %s179 = sphi 0, %s178
      %s193 = sphi 0, %s179
      %s197 = sphi 0, %s197
      %s199 = sphi 0, %s197
      %s200 = sphi 0, %s199
      %s214 = sphi 0, %s200
      %s218 = sphi 0, %s218
      %s220 = sphi 0, %s218
      %s221 = sphi 0, %s220
      %s235 = sphi 0, %s221
    $region4: #{non_local_bb_forward.2} parent=1 // loop_header_branch
      %19 = sbr.rel (%p17) target = $region8
    $region5: #{non_local_bb_forward.2} parent=1 // loop_body
      %s21 = ssub.s32 %s16, 1
      %s22 = ssub.s32 %s16, 2
      %s23 = sadd.s32 %s16, 1
      %s24 = ssub.s32 %s16, %s23
      %p25 = scmp.eq.s32.totalorder %s24, 0
      %s27 = sadd.s32 %s26, 1
      %s28 = scalar_select %p25, %s26, %s27
      %p31 = pneg %p25
      %p32 = scmp.eq.s32.totalorder %s16, 1
      %p33 = por %p31, %p32
      %p34 = scmp.ne.s32.totalorder %s26, %s29
      %p35 = scmp.eq.s32.totalorder %s16, 0
      %p36 = por %p34, %p35
      %p37 = scmp.ne.s32.totalorder %s26, %s29
      %p38 = scmp.eq.s32.totalorder %s21, 1
      %p39 = por %p37, %p38
      %p40 = scmp.ne.s32.totalorder %s29, %s30
      %p41 = scmp.eq.s32.totalorder %s21, 0
      %p42 = por %p40, %p41
      %p43 = scmp.ne.s32.totalorder %s29, %s30
      %p44 = scmp.eq.s32.totalorder %s22, 1
      %p45 = por %p43, %p44
      %p47 = scmp.ne.s32.totalorder %s30, %s46
      %p48 = scmp.eq.s32.totalorder %s22, 0
      %p49 = por %p47, %p48
      %s51 = sadd.s32 %s50, 1
      %p54 = scmp.eq.s32.totalorder %s16, 1
      %p55 = scmp.ne.s32.totalorder %s50, %s52
      %p56 = scmp.eq.s32.totalorder %s16, 0
      %p57 = por %p55, %p56
      %p58 = scmp.ne.s32.totalorder %s50, %s52
      %p59 = scmp.eq.s32.totalorder %s21, 1
      %p60 = por %p58, %p59
      %p61 = scmp.ne.s32.totalorder %s52, %s53
      %p62 = scmp.eq.s32.totalorder %s21, 0
      %p63 = por %p61, %p62
      %p64 = scmp.ne.s32.totalorder %s52, %s53
      %p65 = scmp.eq.s32.totalorder %s22, 1
      %p66 = por %p64, %p65
      %p68 = scmp.ne.s32.totalorder %s53, %s67
      %p69 = scmp.eq.s32.totalorder %s22, 0
      %p70 = por %p68, %p69
      %s72 = sadd.s32 %s71, 1
      %p75 = scmp.eq.s32.totalorder %s16, 1
      %p76 = scmp.ne.s32.totalorder %s71, %s73
      %p77 = scmp.eq.s32.totalorder %s16, 0
      %p78 = por %p76, %p77
      %p79 = scmp.ne.s32.totalorder %s71, %s73
      %p80 = scmp.eq.s32.totalorder %s21, 1
      %p81 = por %p79, %p80
      %p82 = scmp.ne.s32.totalorder %s73, %s74
      %p83 = scmp.eq.s32.totalorder %s21, 0
      %p84 = por %p82, %p83
      %p85 = scmp.ne.s32.totalorder %s73, %s74
      %p86 = scmp.eq.s32.totalorder %s22, 1
      %p87 = por %p85, %p86
      %p89 = scmp.ne.s32.totalorder %s74, %s88
      %p90 = scmp.eq.s32.totalorder %s22, 0
      %p91 = por %p89, %p90
      %s93 = sadd.s32 %s92, 1
      %p96 = scmp.eq.s32.totalorder %s16, 1
      %p97 = scmp.ne.s32.totalorder %s92, %s94
      %p98 = scmp.eq.s32.totalorder %s16, 0
      %p99 = por %p97, %p98
      %p100 = scmp.ne.s32.totalorder %s92, %s94
      %p101 = scmp.eq.s32.totalorder %s21, 1
      %p102 = por %p100, %p101
      %p103 = scmp.ne.s32.totalorder %s94, %s95
      %p104 = scmp.eq.s32.totalorder %s21, 0
      %p105 = por %p103, %p104
      %p106 = scmp.ne.s32.totalorder %s94, %s95
      %p107 = scmp.eq.s32.totalorder %s22, 1
      %p108 = por %p106, %p107
      %p110 = scmp.ne.s32.totalorder %s95, %s109
      %p111 = scmp.eq.s32.totalorder %s22, 0
      %p112 = por %p110, %p111
      %s114 = sadd.s32 %s113, 1
      %p117 = scmp.eq.s32.totalorder %s16, 1
      %p118 = scmp.ne.s32.totalorder %s113, %s115
      %p119 = scmp.eq.s32.totalorder %s16, 0
      %p120 = por %p118, %p119
      %p121 = scmp.ne.s32.totalorder %s113, %s115
      %p122 = scmp.eq.s32.totalorder %s21, 1
      %p123 = por %p121, %p122
      %p124 = scmp.ne.s32.totalorder %s115, %s116
      %p125 = scmp.eq.s32.totalorder %s21, 0
      %p126 = por %p124, %p125
      %p127 = scmp.ne.s32.totalorder %s115, %s116
      %p128 = scmp.eq.s32.totalorder %s22, 1
      %p129 = por %p127, %p128
      %p131 = scmp.ne.s32.totalorder %s116, %s130
      %p132 = scmp.eq.s32.totalorder %s22, 0
      %p133 = por %p131, %p132
      %s135 = sadd.s32 %s134, 1
      %p138 = scmp.eq.s32.totalorder %s16, 1
      %p139 = scmp.ne.s32.totalorder %s134, %s136
      %p140 = scmp.eq.s32.totalorder %s16, 0
      %p141 = por %p139, %p140
      %p142 = scmp.ne.s32.totalorder %s134, %s136
      %p143 = scmp.eq.s32.totalorder %s21, 1
      %p144 = por %p142, %p143
      %p145 = scmp.ne.s32.totalorder %s136, %s137
      %p146 = scmp.eq.s32.totalorder %s21, 0
      %p147 = por %p145, %p146
      %p148 = scmp.ne.s32.totalorder %s136, %s137
      %p149 = scmp.eq.s32.totalorder %s22, 1
      %p150 = por %p148, %p149
      %p152 = scmp.ne.s32.totalorder %s137, %s151
      %p153 = scmp.eq.s32.totalorder %s22, 0
      %p154 = por %p152, %p153
      %s156 = sadd.s32 %s155, 1
      %p159 = scmp.eq.s32.totalorder %s16, 1
      %p160 = scmp.ne.s32.totalorder %s155, %s157
      %p161 = scmp.eq.s32.totalorder %s16, 0
      %p162 = por %p160, %p161
      %p163 = scmp.ne.s32.totalorder %s155, %s157
      %p164 = scmp.eq.s32.totalorder %s21, 1
      %p165 = por %p163, %p164
      %p166 = scmp.ne.s32.totalorder %s157, %s158
      %p167 = scmp.eq.s32.totalorder %s21, 0
      %p168 = por %p166, %p167
      %p169 = scmp.ne.s32.totalorder %s157, %s158
      %p170 = scmp.eq.s32.totalorder %s22, 1
      %p171 = por %p169, %p170
      %p173 = scmp.ne.s32.totalorder %s158, %s172
      %p174 = scmp.eq.s32.totalorder %s22, 0
      %p175 = por %p173, %p174
      %s177 = sadd.s32 %s176, 1
      %p180 = scmp.eq.s32.totalorder %s16, 1
      %p181 = scmp.ne.s32.totalorder %s176, %s178
      %p182 = scmp.eq.s32.totalorder %s16, 0
      %p183 = por %p181, %p182
      %p184 = scmp.ne.s32.totalorder %s176, %s178
      %p185 = scmp.eq.s32.totalorder %s21, 1
      %p186 = por %p184, %p185
      %p187 = scmp.ne.s32.totalorder %s178, %s179
      %p188 = scmp.eq.s32.totalorder %s21, 0
      %p189 = por %p187, %p188
      %p190 = scmp.ne.s32.totalorder %s178, %s179
      %p191 = scmp.eq.s32.totalorder %s22, 1
      %p192 = por %p190, %p191
      %p194 = scmp.ne.s32.totalorder %s179, %s193
      %p195 = scmp.eq.s32.totalorder %s22, 0
      %p196 = por %p194, %p195
      %s198 = sadd.s32 %s197, 1
      %p201 = scmp.eq.s32.totalorder %s16, 1
      %p202 = scmp.ne.s32.totalorder %s197, %s199
      %p203 = scmp.eq.s32.totalorder %s16, 0
      %p204 = por %p202, %p203
      %p205 = scmp.ne.s32.totalorder %s197, %s199
      %p206 = scmp.eq.s32.totalorder %s21, 1
      %p207 = por %p205, %p206
      %p208 = scmp.ne.s32.totalorder %s199, %s200
      %p209 = scmp.eq.s32.totalorder %s21, 0
      %p210 = por %p208, %p209
      %p211 = scmp.ne.s32.totalorder %s199, %s200
      %p212 = scmp.eq.s32.totalorder %s22, 1
      %p213 = por %p211, %p212
      %p215 = scmp.ne.s32.totalorder %s200, %s214
      %p216 = scmp.eq.s32.totalorder %s22, 0
      %p217 = por %p215, %p216
      %s219 = sadd.s32 %s218, 1
      %p222 = scmp.eq.s32.totalorder %s16, 1
      %p223 = scmp.ne.s32.totalorder %s218, %s220
      %p224 = scmp.eq.s32.totalorder %s16, 0
      %p225 = por %p223, %p224
      %p226 = scmp.ne.s32.totalorder %s218, %s220
      %p227 = scmp.eq.s32.totalorder %s21, 1
      %p228 = por %p226, %p227
      %p229 = scmp.ne.s32.totalorder %s220, %s221
      %p230 = scmp.eq.s32.totalorder %s21, 0
      %p231 = por %p229, %p230
      %p232 = scmp.ne.s32.totalorder %s220, %s221
      %p233 = scmp.eq.s32.totalorder %s22, 1
      %p234 = por %p232, %p233
      %p236 = scmp.ne.s32.totalorder %s221, %s235
      %p237 = scmp.eq.s32.totalorder %s22, 0
      %p238 = por %p236, %p237
      %p239 = scmp.le.s32.totalorder 1, %s16
      %p240 = scmp.lt.s32.totalorder %s16, 3
      %p241 = pnand %p239, %p240
      %p242 = pneg %p241
      // Predicated region
      $region9: #{non_local_bb_forward.2} parent=5 // pred_check
        _
      $region10: #{non_local_bb_forward.2} parent=5 // pred_check_branch
        %244 = sbr.rel (%p241) target = $region12
      $region11: #{non_local_bb_forward.2} parent=5 // pred_region
        %s245 = ssub.s32 %s16, 1
        // Predicated region
        $region13: #{non_local_bb_forward.2} parent=11 // pred_check
          %p246 = pneg %p63
        $region14: #{non_local_bb_forward.2} parent=11 // pred_check_branch
          %248 = sbr.rel (%p246) target = $region16
        $region15: #{non_local_bb_forward.2} parent=11 // pred_region
          _
        $region16: #{non_local_bb_forward.2} parent=11 // pred_fallthru
          _
        // Predicated region
        $region17: #{non_local_bb_forward.2} parent=11 // pred_check
          %p249 = pneg %p84
        $region18: #{non_local_bb_forward.2} parent=11 // pred_check_branch
          %251 = sbr.rel (%p249) target = $region20
        $region19: #{non_local_bb_forward.2} parent=11 // pred_region
          _
        $region20: #{non_local_bb_forward.2} parent=11 // pred_fallthru
          _
        // Predicated region
        $region21: #{non_local_bb_forward.2} parent=11 // pred_check
          %p252 = pneg %p105
        $region22: #{non_local_bb_forward.2} parent=11 // pred_check_branch
          %254 = sbr.rel (%p252) target = $region24
        $region23: #{non_local_bb_forward.2} parent=11 // pred_region
          _
        $region24: #{non_local_bb_forward.2} parent=11 // pred_fallthru
          _
        // Predicated region
        $region25: #{non_local_bb_forward.2} parent=11 // pred_check
          %p255 = pneg %p126
        $region26: #{non_local_bb_forward.2} parent=11 // pred_check_branch
          %257 = sbr.rel (%p255) target = $region28
        $region27: #{non_local_bb_forward.2} parent=11 // pred_region
          _
        $region28: #{non_local_bb_forward.2} parent=11 // pred_fallthru
          _
        // Predicated region
        $region29: #{non_local_bb_forward.2} parent=11 // pred_check
          %p258 = pneg %p147
        $region30: #{non_local_bb_forward.2} parent=11 // pred_check_branch
          %260 = sbr.rel (%p258) target = $region32
        $region31: #{non_local_bb_forward.2} parent=11 // pred_region
          _
        $region32: #{non_local_bb_forward.2} parent=11 // pred_fallthru
          _
        // Predicated region
        $region33: #{non_local_bb_forward.2} parent=11 // pred_check
          %p261 = pneg %p168
        $region34: #{non_local_bb_forward.2} parent=11 // pred_check_branch
          %263 = sbr.rel (%p261) target = $region36
        $region35: #{non_local_bb_forward.2} parent=11 // pred_region
          _
        $region36: #{non_local_bb_forward.2} parent=11 // pred_fallthru
          _
        // Predicated region
        $region37: #{non_local_bb_forward.2} parent=11 // pred_check
          %p264 = pneg %p189
        $region38: #{non_local_bb_forward.2} parent=11 // pred_check_branch
          %266 = sbr.rel (%p264) target = $region40
        $region39: #{non_local_bb_forward.2} parent=11 // pred_region
          _
        $region40: #{non_local_bb_forward.2} parent=11 // pred_fallthru
          _
      $region12: #{non_local_bb_forward.2} parent=5 // pred_fallthru
        _
      %p267 = scmp.lt.s32.totalorder %s16, 2
      // Predicated region
      $region41: #{non_local_bb_forward.2} parent=5 // pred_check
        %p268 = pneg %p267
      $region42: #{non_local_bb_forward.2} parent=5 // pred_check_branch
        %270 = sbr.rel (%p268) target = $region44
      $region43: #{non_local_bb_forward.2} parent=5 // pred_region
        // Predicated region
        $region45: #{non_local_bb_forward.2} parent=43 // pred_check
          %p271 = pneg %p36
        $region46: #{non_local_bb_forward.2} parent=43 // pred_check_branch
          %273 = sbr.rel (%p271) target = $region48
        $region47: #{non_local_bb_forward.2} parent=43 // pred_region
          %s274 = sand.u32 %s26, 1
          %s275 = sand.u32 %s26, 1
          %s276 = smul.addr %s275, 24
          %s277 = scalar_lea.vmem [#allocation3], %s276
          %s278 = smul.addr %s16, 8
          %s279 = scalar_lea.vmem %s0, %s278
          // Predicated region
          $region49: #{non_local_bb_forward.2} parent=47 // pred_check
            _
          $region50: #{non_local_bb_forward.2} parent=47 // pred_check_branch
            %281 = sbr.rel (0) target = $region52
          $region51: #{non_local_bb_forward.2} parent=47 // pred_region
            // Predicated region
            $region53: #{non_local_bb_forward.2} parent=51 // pred_check
              _
            $region54: #{non_local_bb_forward.2} parent=51 // pred_check_branch
              %283 = sbr.rel (0) target = $region56
            $region55: #{non_local_bb_forward.2} parent=51 // pred_region
              // Predicated region
              $region68: #{non_local_bb_forward.2} parent=55 // pred_check
                _
              $region69: #{non_local_bb_forward.2} parent=55 // pred_check_branch
                %302 = sbr.rel (0) target = $region71
              $region70: #{non_local_bb_forward.2} parent=55 // pred_region
                loop: start=0, step=1, limit=1
                $region72: #{non_local_bb_forward.2} parent=70 // loop_pre_header
                  _
                $region73: #{non_local_bb_forward.2} parent=70 // loop_header
                  %s304 = sphi 0, %s308
                  %p305 = scmp.ge.s32.totalorder %s304, 1
                  %s309 = sphi %s279, %s279
                  %s310 = sphi %s277, %s277
                $region74: #{non_local_bb_forward.2} parent=70 // loop_header_branch
                  %307 = sbr.rel (%p305) target = $region78
                $region75: #{non_local_bb_forward.2} parent=70 // loop_body
                  %v311 = vld [vmem:[%s309] sm:$0xff]
                  %312 = vst [vmem:[%s310] sm:$0xff] %v311
                  %v313 = vld [vmem:[%s309 + $0x10] sm:$0xff]
                  %314 = vst [vmem:[%s310 + $0x8] sm:$0xff] %v313
                  %v315 = vld [vmem:[%s309 + $0x20] sm:$0xff]
                  %316 = vst [vmem:[%s310 + $0x10] sm:$0xff] %v315
                $region76: #{non_local_bb_forward.2} parent=70 // loop_footer
                  %s308 = sadd.s32 1, %s304
                $region77: #{non_local_bb_forward.2} parent=70 // loop_footer_branch
                  %303 = sbr.rel target = $region73
                $region78: #{non_local_bb_forward.2} parent=70 // loop_exit
                  _
              $region71: #{non_local_bb_forward.2} parent=55 // pred_fallthru
                _
              // Predicated region
              $region79: #{non_local_bb_forward.2} parent=55 // pred_check
                _
              $region80: #{non_local_bb_forward.2} parent=55 // pred_check_branch
                %318 = sbr.rel target = $region82
              $region81: #{non_local_bb_forward.2} parent=55 // pred_region
                _
              $region82: #{non_local_bb_forward.2} parent=55 // pred_fallthru
                _
            $region56: #{non_local_bb_forward.2} parent=51 // pred_fallthru
              _
            // Predicated region
            $region57: #{non_local_bb_forward.2} parent=51 // pred_check
              _
            $region58: #{non_local_bb_forward.2} parent=51 // pred_check_branch
              %285 = sbr.rel target = $region60
            $region59: #{non_local_bb_forward.2} parent=51 // pred_region
              loop: start=0, step=1, limit=1
              $region61: #{non_local_bb_forward.2} parent=59 // loop_pre_header
                _
              $region62: #{non_local_bb_forward.2} parent=59 // loop_header
                %s288 = sphi 0, %s292
                %p289 = scmp.ge.s32.totalorder %s288, 1
                %s293 = sphi %s279, %s279
                %s294 = sphi %s277, %s277
              $region63: #{non_local_bb_forward.2} parent=59 // loop_header_branch
                %291 = sbr.rel (%p289) target = $region67
              $region64: #{non_local_bb_forward.2} parent=59 // loop_body
                %v295 = vld [vmem:[%s293] sm:$0xff]
                %296 = vst [vmem:[%s294] sm:$0xff] %v295
                %v297 = vld [vmem:[%s293 + $0x10] sm:$0xff]
                %298 = vst [vmem:[%s294 + $0x8] sm:$0xff] %v297
                %v299 = vld [vmem:[%s293 + $0x20] sm:$0xff]
                %300 = vst [vmem:[%s294 + $0x10] sm:$0xff] %v299
              $region65: #{non_local_bb_forward.2} parent=59 // loop_footer
                %s292 = sadd.s32 1, %s288
              $region66: #{non_local_bb_forward.2} parent=59 // loop_footer_branch
                %287 = sbr.rel target = $region62
              $region67: #{non_local_bb_forward.2} parent=59 // loop_exit
                _
            $region60: #{non_local_bb_forward.2} parent=51 // pred_fallthru
              _
          $region52: #{non_local_bb_forward.2} parent=47 // pred_fallthru
            _
          %319 = vnop
        $region48: #{non_local_bb_forward.2} parent=43 // pred_fallthru
          _
      $region44: #{non_local_bb_forward.2} parent=5 // pred_fallthru
        _
      %p320 = scmp.le.s32.totalorder 1, %s16
      %p321 = scmp.lt.s32.totalorder %s16, 3
      %p322 = pnand %p320, %p321
      %p323 = pneg %p322
      // Predicated region
      $region83: #{non_local_bb_forward.2} parent=5 // pred_check
        _
      $region84: #{non_local_bb_forward.2} parent=5 // pred_check_branch
        %325 = sbr.rel (%p322) target = $region86
      $region85: #{non_local_bb_forward.2} parent=5 // pred_region
        %s326 = ssub.s32 %s16, 1
        %s327 = sand.u32 %s29, 1
        %s328 = sand.u32 %s29, 1
        %s329 = smul.addr %s328, 24
        %s330 = scalar_lea.vmem [#allocation3], %s329
        // Predicated region
        $region87: #{non_local_bb_forward.2} parent=85 // pred_check
          %p331 = pneg %p42
        $region88: #{non_local_bb_forward.2} parent=85 // pred_check_branch
          %333 = sbr.rel (%p331) target = $region90
        $region89: #{non_local_bb_forward.2} parent=85 // pred_region
          _
        $region90: #{non_local_bb_forward.2} parent=85 // pred_fallthru
          _
        %s334 = sand.u32 %s29, 1
        %s335 = sand.u32 %s29, 1
        %s336 = smul.addr %s335, 24
        %s337 = scalar_lea.vmem [#allocation3], %s336
        %p338 = pneg %p42
        %p339 = pneg %p39
        %p340 = pneg %p63
        %p341 = pneg %p60
        %p342 = pneg %p84
        %p343 = pneg %p81
        %p344 = pneg %p105
        %p345 = pneg %p102
        %p346 = pneg %p126
        %p347 = pneg %p123
        %p348 = pneg %p147
        %p349 = pneg %p144
        %p350 = pneg %p168
        %p351 = pneg %p165
        %p352 = pneg %p189
        %p353 = pneg %p186
        %p354 = pneg %p210
        %p355 = pneg %p207
        %p356 = pneg %p231
        %p357 = pneg %p228
        %p358 = scmp.eq.s32.totalorder %s21, 0
        // Predicated region
        $region91: #{non_local_bb_forward.2} parent=85 // pred_check
          %p359 = pneg %p358
        $region92: #{non_local_bb_forward.2} parent=85 // pred_check_branch
          %361 = sbr.rel (%p359) target = $region94
        $region93: #{non_local_bb_forward.2} parent=85 // pred_region
          %vm362 = vcmask 64512
          %363 = vst.msk [vmem:[#allocation2] sm:$0xff] %vm362, 0.0
        $region94: #{non_local_bb_forward.2} parent=85 // pred_fallthru
          _
        %v364 = vld [vmem:[%s1] sm:$0xff]
        %v365 = vld [vmem:[%s1 + $0x8] sm:$0xff]
        %v366 = vld [vmem:[%s330] sm:$0xff]
        %v367 = vld [vmem:[%s330 + $0x8] sm:$0xff]
        %v368 = vld [vmem:[%s330 + $0x10] sm:$0x7]
        %v369 = vld [vmem:[%s2] sm:$0xff]
        %v370 = vld [vmem:[%s2 + $0x8] sm:$0xff]
        %372 = vset.pattern.permute.xlu0 0
        %373 = vperm.xlu0 %372, %v369
        %v374 = vpop.permute.xlu0 %373
        %377 = vset.pattern.permute.xlu0 0
        %378 = vperm.xlu0 %377, %v370
        %v379 = vpop.permute.xlu0 %378
        %vm381 = vcmask 154624
        %v383 = vsel %vm381, %v364, 0
        %v386 = vsel %vm381, %v365, 0
        %vm388 = vcmask 1042432
        %v390 = vsel %vm388, %v368, 0
        %392 = vmatprep.subr.mxu0 0.0
        %393 = vmatpush1.msra.mxu0 %v366
        %394 = vmatprep.subr.mxu0 0.0
        %395 = vmatpush1.msra.mxu0 %v367
        %396 = vmatprep.subr.mxu0 0.0
        %397 = vmatpush1.msra.mxu0 %v390
        %398 = vmatprep.subr.mxu0 0.0
        %399 = vmatpush1.msra.mxu0 0.0
        %400 = vmatprep.subr.mxu0 0.0
        %401 = vmatpush1.msra.mxu0 0.0
        %402 = vmatprep.subr.mxu0 0.0
        %403 = vmatpush1.msra.mxu0 0.0
        %404 = vmatprep.subr.mxu0 0.0
        %405 = vmatpush1.msra.mxu0 0.0
        %406 = vmatprep.subr.mxu0 0.0
        %407 = vmatpush1.msra.mxu0 0.0
        %408 = vmatprep.subr.mxu0 0.0
        %409 = vmatpush1.msra.mxu0 0.0
        %410 = vmatprep.subr.mxu0 0.0
        %411 = vmatpush1.msra.mxu0 0.0
        %412 = vmatprep.subr.mxu0 0.0
        %413 = vmatpush1.msra.mxu0 0.0
        %414 = vmatprep.subr.mxu0 0.0
        %415 = vmatpush1.msra.mxu0 0.0
        %416 = vmatprep.subr.mxu0 0.0
        %417 = vmatpush1.msra.mxu0 0.0
        %418 = vmatprep.subr.mxu0 0.0
        %419 = vmatpush1.msra.mxu0 0.0
        %420 = vmatprep.subr.mxu0 0.0
        %421 = vmatpush1.msra.mxu0 0.0
        %422 = vmatprep.subr.mxu0 0.0
        %423 = vmatpush1.msra.mxu0 0.0
        %424 = vmatprep.subr.mxu0 0.0
        %425 = vmatpush1.msra.mxu0 0.0
        %426 = vmatprep.subr.mxu0 0.0
        %427 = vmatpush1.msra.mxu0 0.0
        %428 = vmatprep.subr.mxu0 0.0
        %429 = vmatpush1.msra.mxu0 0.0
        %430 = vmatprep.subr.mxu0 0.0
        %431 = vmatpush1.msra.mxu0 0.0
        %432 = vmatprep.subr.mxu0 0.0
        %433 = vmatpush1.msra.mxu0 0.0
        %434 = vmatprep.subr.mxu0 0.0
        %435 = vmatpush1.msra.mxu0 0.0
        %436 = vmatprep.subr.mxu0 0.0
        %437 = vmatpush1.msra.mxu0 0.0
        %438 = vmatprep.subr.mxu0 0.0
        %439 = vmatpush1.msra.mxu0 0.0
        %440 = vmatprep.subr.mxu0 0.0
        %441 = vmatpush1.msra.mxu0 0.0
        %442 = vmatprep.subr.mxu0 0.0
        %443 = vmatpush1.msra.mxu0 0.0
        %444 = vmatprep.subr.mxu0 0.0
        %445 = vmatpush1.msra.mxu0 0.0
        %446 = vmatprep.subr.mxu0 0.0
        %447 = vmatpush1.msra.mxu0 0.0
        %448 = vmatprep.subr.mxu0 0.0
        %449 = vmatpush1.msra.mxu0 0.0
        %450 = vmatprep.subr.mxu0 0.0
        %451 = vmatpush1.msra.mxu0 0.0
        %452 = vmatprep.subr.mxu0 0.0
        %453 = vmatpush1.msra.mxu0 0.0
        %454 = vmatprep.subr.mxu0 0.0
        %455 = vmatpush1.msra.mxu0 0.0
        %456 = vmatprep.mubr.f32.mxu0 0.0
        %457 = vmatmul.mubr.f32.gmra.mrb[0].mxu0 %v383
        %v458 = vpop.f32.mrb[0].mxu0
        %v459 = vadd.f32 %v374, %v458
        %v460 = vpop.f32.mrb[0].mxu0
        %461 = vmatprep.mubr.f32.mxu0 0.0
        %462 = vmatmul.mubr.f32.gmra.mrb[0].mxu0 %v386
        %v463 = vpop.f32.mrb[0].mxu0
        %v464 = vadd.f32 %v379, %v463
        %v465 = vpop.f32.mrb[0].mxu0
        %466 = vdwg.mxu0
        %v467 = vld [vmem:[#allocation2] sm:$0xff]
        %468 = vmatprep.subr.mxu0 0.0
        %469 = vmatpush1.xpose.msra.mxu0 %v459
        %470 = vmatprep.subr.mxu0 0.0
        %471 = vmatpush1.xpose.msra.mxu0 0.0
        %472 = vmatprep.subr.mxu0 0.0
        %473 = vmatpush1.xpose.msra.mxu0 0.0
        %474 = vmatprep.subr.mxu0 0.0
        %475 = vmatpush1.xpose.msra.mxu0 0.0
        %476 = vmatprep.subr.mxu0 0.0
        %477 = vmatpush1.xpose.msra.mxu0 0.0
        %478 = vmatprep.subr.mxu0 0.0
        %479 = vmatpush1.xpose.msra.mxu0 0.0
        %480 = vmatprep.subr.mxu0 0.0
        %481 = vmatpush1.xpose.msra.mxu0 0.0
        %482 = vmatprep.subr.mxu0 0.0
        %483 = vmatpush1.xpose.msra.mxu0 0.0
        %484 = vmatprep.subr.mxu0 0.0
        %485 = vmatpush1.xpose.msra.mxu0 0.0
        %486 = vmatprep.subr.mxu0 0.0
        %487 = vmatpush1.xpose.msra.mxu0 0.0
        %488 = vmatprep.subr.mxu0 0.0
        %489 = vmatpush1.xpose.msra.mxu0 0.0
        %490 = vmatprep.subr.mxu0 0.0
        %491 = vmatpush1.xpose.msra.mxu0 0.0
        %492 = vmatprep.subr.mxu0 0.0
        %493 = vmatpush1.xpose.msra.mxu0 0.0
        %494 = vmatprep.subr.mxu0 0.0
        %495 = vmatpush1.xpose.msra.mxu0 0.0
        %496 = vmatprep.subr.mxu0 0.0
        %497 = vmatpush1.xpose.msra.mxu0 0.0
        %498 = vmatprep.subr.mxu0 0.0
        %499 = vmatpush1.xpose.msra.mxu0 0.0
        %500 = vmatprep.subr.mxu0 0.0
        %501 = vmatpush1.xpose.msra.mxu0 0.0
        %502 = vmatprep.subr.mxu0 0.0
        %503 = vmatpush1.xpose.msra.mxu0 0.0
        %504 = vmatprep.subr.mxu0 0.0
        %505 = vmatpush1.xpose.msra.mxu0 0.0
        %506 = vmatprep.subr.mxu0 0.0
        %507 = vmatpush1.xpose.msra.mxu0 0.0
        %508 = vmatprep.subr.mxu0 0.0
        %509 = vmatpush1.xpose.msra.mxu0 0.0
        %510 = vmatprep.subr.mxu0 0.0
        %511 = vmatpush1.xpose.msra.mxu0 0.0
        %512 = vmatprep.subr.mxu0 0.0
        %513 = vmatpush1.xpose.msra.mxu0 0.0
        %514 = vmatprep.subr.mxu0 0.0
        %515 = vmatpush1.xpose.msra.mxu0 0.0
        %516 = vmatprep.subr.mxu0 0.0
        %517 = vmatpush1.xpose.msra.mxu0 0.0
        %518 = vmatprep.subr.mxu0 0.0
        %519 = vmatpush1.xpose.msra.mxu0 0.0
        %520 = vmatprep.subr.mxu0 0.0
        %521 = vmatpush1.xpose.msra.mxu0 0.0
        %522 = vmatprep.subr.mxu0 0.0
        %523 = vmatpush1.xpose.msra.mxu0 0.0
        %524 = vmatprep.subr.mxu0 0.0
        %525 = vmatpush1.xpose.msra.mxu0 0.0
        %526 = vmatprep.subr.mxu0 0.0
        %527 = vmatpush1.xpose.msra.mxu0 0.0
        %528 = vmatprep.subr.mxu0 0.0
        %529 = vmatpush1.xpose.msra.mxu0 0.0
        %530 = vmatprep.subr.mxu0 0.0
        %531 = vmatpush1.xpose.msra.mxu0 0.0
        %532 = vmatprep.mubr.f32.mxu0 0.0
        %533 = vmatmul.mubr.f32.gmra.mrb[0].mxu0 %v464
        %v534 = vpop.f32.mrb[0].mxu0
        %v535 = vadd.f32 0.0, %v534
        %v536 = vpop.f32.mrb[0].mxu0
        %537 = vdwg.mxu0
        %v538 = vadd.f32 %v467, %v535
        %vm539 = vcmask 64512
        %540 = vst.msk [vmem:[#allocation2] sm:$0xff] %vm539, %v538
        %p541 = scmp.eq.s32.totalorder %s21, 1
        // Predicated region
        $region95: #{non_local_bb_forward.2} parent=85 // pred_check
          %p542 = pneg %p541
        $region96: #{non_local_bb_forward.2} parent=85 // pred_check_branch
          %544 = sbr.rel (%p542) target = $region98
        $region97: #{non_local_bb_forward.2} parent=85 // pred_region
          %v545 = vld [vmem:[%s5] sm:$0xff]
          %v546 = vld [vmem:[%s5 + $0x8] sm:$0xff]
          %v547 = vld [vmem:[#allocation2] sm:$0xff]
          %v548 = vmul.f32 %v547, 9.645062e-05
          %v550 = vsel %vm539, %v545, 0
          %v553 = vsel %vm539, %v546, 0
          %555 = vmatprep.subr.mxu0 0.0
          %556 = vmatpush1.msra.mxu0 %v548
          %557 = vmatprep.subr.mxu0 0.0
          %558 = vmatpush1.msra.mxu0 0.0
          %559 = vmatprep.subr.mxu0 0.0
          %560 = vmatpush1.msra.mxu0 0.0
          %561 = vmatprep.subr.mxu0 0.0
          %562 = vmatpush1.msra.mxu0 0.0
          %563 = vmatprep.subr.mxu0 0.0
          %564 = vmatpush1.msra.mxu0 0.0
          %565 = vmatprep.subr.mxu0 0.0
          %566 = vmatpush1.msra.mxu0 0.0
          %567 = vmatprep.subr.mxu0 0.0
          %568 = vmatpush1.msra.mxu0 0.0
          %569 = vmatprep.subr.mxu0 0.0
          %570 = vmatpush1.msra.mxu0 0.0
          %571 = vmatprep.subr.mxu0 0.0
          %572 = vmatpush1.msra.mxu0 0.0
          %573 = vmatprep.subr.mxu0 0.0
          %574 = vmatpush1.msra.mxu0 0.0
          %575 = vmatprep.subr.mxu0 0.0
          %576 = vmatpush1.msra.mxu0 0.0
          %577 = vmatprep.subr.mxu0 0.0
          %578 = vmatpush1.msra.mxu0 0.0
          %579 = vmatprep.subr.mxu0 0.0
          %580 = vmatpush1.msra.mxu0 0.0
          %581 = vmatprep.subr.mxu0 0.0
          %582 = vmatpush1.msra.mxu0 0.0
          %583 = vmatprep.subr.mxu0 0.0
          %584 = vmatpush1.msra.mxu0 0.0
          %585 = vmatprep.subr.mxu0 0.0
          %586 = vmatpush1.msra.mxu0 0.0
          %587 = vmatprep.subr.mxu0 0.0
          %588 = vmatpush1.msra.mxu0 0.0
          %589 = vmatprep.subr.mxu0 0.0
          %590 = vmatpush1.msra.mxu0 0.0
          %591 = vmatprep.subr.mxu0 0.0
          %592 = vmatpush1.msra.mxu0 0.0
          %593 = vmatprep.subr.mxu0 0.0
          %594 = vmatpush1.msra.mxu0 0.0
          %595 = vmatprep.subr.mxu0 0.0
          %596 = vmatpush1.msra.mxu0 0.0
          %597 = vmatprep.subr.mxu0 0.0
          %598 = vmatpush1.msra.mxu0 0.0
          %599 = vmatprep.subr.mxu0 0.0
          %600 = vmatpush1.msra.mxu0 0.0
          %601 = vmatprep.subr.mxu0 0.0
          %602 = vmatpush1.msra.mxu0 0.0
          %603 = vmatprep.subr.mxu0 0.0
          %604 = vmatpush1.msra.mxu0 0.0
          %605 = vmatprep.subr.mxu0 0.0
          %606 = vmatpush1.msra.mxu0 0.0
          %607 = vmatprep.subr.mxu0 0.0
          %608 = vmatpush1.msra.mxu0 0.0
          %609 = vmatprep.subr.mxu0 0.0
          %610 = vmatpush1.msra.mxu0 0.0
          %611 = vmatprep.subr.mxu0 0.0
          %612 = vmatpush1.msra.mxu0 0.0
          %613 = vmatprep.subr.mxu0 0.0
          %614 = vmatpush1.msra.mxu0 0.0
          %615 = vmatprep.subr.mxu0 0.0
          %616 = vmatpush1.msra.mxu0 0.0
          %617 = vmatprep.subr.mxu0 0.0
          %618 = vmatpush1.msra.mxu0 0.0
          %619 = vmatprep.mubr.f32.mxu0 0.0
          %620 = vmatmul.mubr.f32.gmra.mrb[0].mxu0 %v550
          %v621 = vpop.f32.mrb[0].mxu0
          %v622 = vadd.f32 0.0, %v621
          %v623 = vpop.f32.mrb[0].mxu0
          %624 = vmatprep.mubr.f32.mxu0 0.0
          %625 = vmatmul.mubr.f32.gmra.mrb[0].mxu0 %v553
          %v626 = vpop.f32.mrb[0].mxu0
          %v627 = vadd.f32 0.0, %v626
          %v628 = vpop.f32.mrb[0].mxu0
          %629 = vdwg.mxu0
          %v630 = vld [vmem:[%s7] sm:$0xff]
          %v631 = vld [vmem:[%s7 + $0x8] sm:$0xff]
          %v632 = vld [vmem:[%s3] sm:$0xff]
          %v634 = vsel %vm539, %v622, 0
          %v637 = vsel %vm539, %v627, 0
          %639 = vmatprep.subr.mxu0 0.0
          %640 = vmatpush1.msra.mxu0 %v632
          %641 = vmatprep.subr.mxu0 0.0
          %642 = vmatpush1.msra.mxu0 0.0
          %643 = vmatprep.subr.mxu0 0.0
          %644 = vmatpush1.msra.mxu0 0.0
          %645 = vmatprep.subr.mxu0 0.0
          %646 = vmatpush1.msra.mxu0 0.0
          %647 = vmatprep.subr.mxu0 0.0
          %648 = vmatpush1.msra.mxu0 0.0
          %649 = vmatprep.subr.mxu0 0.0
          %650 = vmatpush1.msra.mxu0 0.0
          %651 = vmatprep.subr.mxu0 0.0
          %652 = vmatpush1.msra.mxu0 0.0
          %653 = vmatprep.subr.mxu0 0.0
          %654 = vmatpush1.msra.mxu0 0.0
          %655 = vmatprep.subr.mxu0 0.0
          %656 = vmatpush1.msra.mxu0 0.0
          %657 = vmatprep.subr.mxu0 0.0
          %658 = vmatpush1.msra.mxu0 0.0
          %659 = vmatprep.subr.mxu0 0.0
          %660 = vmatpush1.msra.mxu0 0.0
          %661 = vmatprep.subr.mxu0 0.0
          %662 = vmatpush1.msra.mxu0 0.0
          %663 = vmatprep.subr.mxu0 0.0
          %664 = vmatpush1.msra.mxu0 0.0
          %665 = vmatprep.subr.mxu0 0.0
          %666 = vmatpush1.msra.mxu0 0.0
          %667 = vmatprep.subr.mxu0 0.0
          %668 = vmatpush1.msra.mxu0 0.0
          %669 = vmatprep.subr.mxu0 0.0
          %670 = vmatpush1.msra.mxu0 0.0
          %671 = vmatprep.subr.mxu0 0.0
          %672 = vmatpush1.msra.mxu0 0.0
          %673 = vmatprep.subr.mxu0 0.0
          %674 = vmatpush1.msra.mxu0 0.0
          %675 = vmatprep.subr.mxu0 0.0
          %676 = vmatpush1.msra.mxu0 0.0
          %677 = vmatprep.subr.mxu0 0.0
          %678 = vmatpush1.msra.mxu0 0.0
          %679 = vmatprep.subr.mxu0 0.0
          %680 = vmatpush1.msra.mxu0 0.0
          %681 = vmatprep.subr.mxu0 0.0
          %682 = vmatpush1.msra.mxu0 0.0
          %683 = vmatprep.subr.mxu0 0.0
          %684 = vmatpush1.msra.mxu0 0.0
          %685 = vmatprep.subr.mxu0 0.0
          %686 = vmatpush1.msra.mxu0 0.0
          %687 = vmatprep.subr.mxu0 0.0
          %688 = vmatpush1.msra.mxu0 0.0
          %689 = vmatprep.subr.mxu0 0.0
          %690 = vmatpush1.msra.mxu0 0.0
          %691 = vmatprep.subr.mxu0 0.0
          %692 = vmatpush1.msra.mxu0 0.0
          %693 = vmatprep.subr.mxu0 0.0
          %694 = vmatpush1.msra.mxu0 0.0
          %695 = vmatprep.subr.mxu0 0.0
          %696 = vmatpush1.msra.mxu0 0.0
          %697 = vmatprep.subr.mxu0 0.0
          %698 = vmatpush1.msra.mxu0 0.0
          %699 = vmatprep.subr.mxu0 0.0
          %700 = vmatpush1.msra.mxu0 0.0
          %701 = vmatprep.subr.mxu0 0.0
          %702 = vmatpush1.msra.mxu0 0.0
          %703 = vmatprep.mubr.f32.mxu0 0.0
          %704 = vmatmul.mubr.f32.gmra.mrb[0].mxu0 %v634
          %v705 = vpop.f32.mrb[0].mxu0
          %v706 = vadd.f32 0.0, %v705
          %v707 = vpop.f32.mrb[0].mxu0
          %708 = vmatprep.mubr.f32.mxu0 0.0
          %709 = vmatmul.mubr.f32.gmra.mrb[0].mxu0 %v637
          %v710 = vpop.f32.mrb[0].mxu0
          %v711 = vadd.f32 0.0, %v710
          %v712 = vpop.f32.mrb[0].mxu0
          %713 = vdwg.mxu0
          %v714 = vadd.f32 %v630, %v706
          %v715 = vadd.f32 %v631, %v711
          %716 = vst.msk [vmem:[%s8] sm:$0xff] %vm381, %v714
          %717 = vst.msk [vmem:[%s8 + $0x8] sm:$0xff] %vm381, %v715
          %v718 = vld [vmem:[%s4] sm:$0x1]
          %v720 = vlaneseq
          %v721 = vshrl.u32 %v720, 7
          %v722 = vsub.s32 0, %v721
          %v723 = vrot.slane %v718, %v722
          %v725 = vmul.f32 %v622, %v723
          %v726 = vmul.f32 %v627, %v723
          %v727 = vsel %vm539, %v725, 0.0
          %728 = vadd.xlane.f32.xlu0 %v727
          %v729 = vpop.xlane.xlu0 %728
          %v730 = vsel %vm539, %v726, 0.0
          %731 = vadd.xlane.f32.xlu0 %v730
          %v732 = vpop.xlane.xlu0 %731
          %v733 = vld [vmem:[%s6] sm:$0xff]
          %v734 = vld [vmem:[%s6 + $0x8] sm:$0xff]
          %v735 = vadd.f32 %v729, %v733
          %v736 = vadd.f32 %v732, %v734
          %vm737 = vcmask 7168
          %738 = vst.msk [vmem:[%s9] sm:$0xff] %vm737, %v735
          %739 = vst.msk [vmem:[%s9 + $0x8] sm:$0xff] %vm737, %v736
        $region98: #{non_local_bb_forward.2} parent=85 // pred_fallthru
          _
        // Predicated region
        $region99: #{non_local_bb_forward.2} parent=85 // pred_check
          %p740 = pneg %p207
        $region100: #{non_local_bb_forward.2} parent=85 // pred_check_branch
          %742 = sbr.rel (%p740) target = $region102
        $region101: #{non_local_bb_forward.2} parent=85 // pred_region
          _
        $region102: #{non_local_bb_forward.2} parent=85 // pred_fallthru
          _
        // Predicated region
        $region103: #{non_local_bb_forward.2} parent=85 // pred_check
          %p743 = pneg %p228
        $region104: #{non_local_bb_forward.2} parent=85 // pred_check_branch
          %745 = sbr.rel (%p743) target = $region106
        $region105: #{non_local_bb_forward.2} parent=85 // pred_region
          _
        $region106: #{non_local_bb_forward.2} parent=85 // pred_fallthru
          _
        // Predicated region
        $region107: #{non_local_bb_forward.2} parent=85 // pred_check
          %p746 = pneg %p207
        $region108: #{non_local_bb_forward.2} parent=85 // pred_check_branch
          %748 = sbr.rel (%p746) target = $region110
        $region109: #{non_local_bb_forward.2} parent=85 // pred_region
          _
        $region110: #{non_local_bb_forward.2} parent=85 // pred_fallthru
          _
        // Predicated region
        $region111: #{non_local_bb_forward.2} parent=85 // pred_check
          %p749 = pneg %p228
        $region112: #{non_local_bb_forward.2} parent=85 // pred_check_branch
          %751 = sbr.rel (%p749) target = $region114
        $region113: #{non_local_bb_forward.2} parent=85 // pred_region
          _
        $region114: #{non_local_bb_forward.2} parent=85 // pred_fallthru
          _
      $region86: #{non_local_bb_forward.2} parent=5 // pred_fallthru
        _
      %p752 = scmp.le.s32.totalorder 2, %s16
      // Predicated region
      $region115: #{non_local_bb_forward.2} parent=5 // pred_check
        %p753 = pneg %p752
      $region116: #{non_local_bb_forward.2} parent=5 // pred_check_branch
        %755 = sbr.rel (%p753) target = $region118
      $region117: #{non_local_bb_forward.2} parent=5 // pred_region
        %s756 = ssub.s32 %s16, 2
      $region118: #{non_local_bb_forward.2} parent=5 // pred_fallthru
        _
    $region6: #{non_local_bb_forward.2} parent=1 // loop_footer
      %s20 = sadd.s32 1, %s16
    $region7: #{non_local_bb_forward.2} parent=1 // loop_footer_branch
      %15 = sbr.rel target = $region3
    $region8: #{non_local_bb_forward.2} parent=1 // loop_exit
      _

</llo_original>
